<compile_context>
chip_gen: v6e
topology: v6e:2x2x1
jax: 0.10.0
libtpu: 0.0.40
codegen_flags: <defaults>
</compile_context>

<pallas_src>
import jax
import jax.numpy as jnp
import numpy as np
from jax.experimental import pallas as pl
from jax.experimental.pallas import tpu as pltpu


def _round_up(a, m):
    return ((a + m - 1) // m) * m


def ndsgcn_forward(ef, link, t, x, params, *, batch_tile=None):
    """Pallas implementation of NDSGCN.forward; returns (B, N*G)."""
    W_e2k, b_e2k, W_t2k, W_k3, b_k3, W_gc, b_gc = params   # torch (out, in) layout
    N, E, F = ef.shape
    B, T = t.shape
    C = x.shape[-1]
    H = W_e2k.shape[0]
    K = W_k3.shape[0]
    G = b_gc.shape[-1]
    NE, KC, NG = N * E, K * C, N * G
    f32 = jnp.float32

    # ----- batch tiling -------------------------------------------------------
    # One grid step processes `BT` batch elements with their (station, edge)
    # rows stacked along the sublane axis of every GEMM.  For small batches we
    # collapse the grid entirely (BT = B, grid length 1) so the fixed per-step
    # cost is paid exactly once; for large B pass a batch_tile that divides B
    # (and is a multiple of 8 if < B) to regain pipelining / megacore steps.
    BT = B if batch_tile is None else batch_tile
    assert B % BT == 0, "batch_tile must divide the batch size"
    assert BT == B or (BT % 8 == 0 and (BT * N) % 8 == 0), (
        "a partial batch tile must keep sublane dims multiples of 8")
    num_tiles = B // BT
    BNE, BN = BT * NE, BT * N

    # ----- host/XLA glue: hoisted batch-invariant compute ---------------------
    hi = jax.lax.Precision.HIGHEST
    ef_flat = ef.reshape(NE, F)
    y0 = jnp.dot(ef_flat, W_e2k.T, precision=hi) + b_e2k.reshape(1, H)     # (NE, H)

    x2 = x.reshape(B * N, C)
    link_flat = link.reshape(NE, N)
    w_k3_t = W_k3.T                                                        # (H, K)

    # ----- constant 0/1 grouping / expansion matrices (packed, aligned) -------
    eye_bt = jnp.eye(BT, dtype=f32)

    # y_stack = tile_mat @ y0 + rep_mat @ tk  (stack per-(b, station, edge) rows)
    tile_mat = jnp.tile(jnp.eye(NE, dtype=f32), (BT, 1))                   # (BNE, NE)
    rep_mat = jnp.kron(eye_bt, jnp.ones((NE, 1), f32))                     # (BNE, BT)
    NE_lanes = _round_up(NE, 128)
    expand_pack = jnp.zeros((BNE, NE_lanes + BT), f32)
    expand_pack = expand_pack.at[:, :NE].set(tile_mat).at[:, NE_lanes:].set(rep_mat)

    link_big = jnp.kron(eye_bt, link_flat)                                 # (BNE, BN)
    gsum_b = jnp.kron(jnp.eye(BN, dtype=f32), jnp.ones((1, E), f32))       # (BN, BNE)
    gsel = jnp.kron(eye_bt, jnp.ones((1, N), f32))                         # (BT, BN)

    # [y0 ; W_t2k^T] row-packed (W_t2k^T rows start at an 8-aligned offset).
    NE_pad = _round_up(NE, 8)
    yw_pack = jnp.zeros((NE_pad + T, H), f32)
    yw_pack = yw_pack.at[:NE].set(y0).at[NE_pad:].set(W_t2k.T)

    # [r_k ; r_c] row-packed kron expanders (k-major / c-minor layout).
    K_pad = _round_up(K, 8)
    r_k = jnp.kron(jnp.eye(K, dtype=f32), jnp.ones((1, C), f32))           # (K, KC)
    r_c = jnp.kron(jnp.ones((1, K), f32), jnp.eye(C, dtype=f32))           # (C, KC)
    r_pack = jnp.zeros((K_pad + C, KC), f32)
    r_pack = r_pack.at[:K].set(r_k).at[K_pad:].set(r_c)

    # [W_gc^T tiled per station ; diagonal-block mask] row-packed.
    KC_pad = _round_up(KC, 8)
    w_wide = jnp.tile(W_gc.T, (1, N))                                      # (KC, NG)
    mask_big = jnp.tile(jnp.kron(jnp.eye(N, dtype=f32), jnp.ones((1, G), f32)),
                        (BT, 1))                                           # (BN, NG)
    wm_pack = jnp.zeros((KC_pad + BN, NG), f32)
    wm_pack = wm_pack.at[:KC].set(w_wide).at[KC_pad:].set(mask_big)

    # [b_k3 | b_gc tiled] lane-packed (b_gc starts at a 128-aligned lane).
    K_lanes = _round_up(K, 128)
    bias_pack = jnp.zeros((1, K_lanes + NG), f32)
    bias_pack = bias_pack.at[0, :K].set(b_k3).at[0, K_lanes:].set(jnp.tile(b_gc, N))

    # NOTE(perf): for bigger graphs cast the exact-0/1 constants (and, if the
    # tolerance budget allows, x / the weights) to bfloat16 on v6e/v7x, add a
    # station-tiling grid axis before link_big / gsum_b / wm_pack (which scale
    # ~quadratically in BT*N) approach v7x's 64 MiB VMEM, and switch the wide
    # gc GEMM to the shared-weight z @ W_gc^T form once N*G exceeds one MXU
    # pass.  Unnecessary at these sizes.

    def kernel(t_ref, x_ref, yw_ref, wk3_ref, bias_ref, expand_ref,
               link_ref, r_ref, gsum_ref, wm_ref, gsel_ref, o_ref):
        t_b = t_ref[...]                                    # (BT, T)
        x_b = x_ref[...]                                    # (BN, C)

        # t2k_L2(t) for the whole batch tile, then stack it with the hoisted
        # y0 via constant tile/repeat GEMMs: y[(b,n,e), :] = y0[(n,e), :] + tk[b, :].
        tk = jnp.dot(t_b, yw_ref[NE_pad:, :], preferred_element_type=f32)  # (BT, H)
        y = (jnp.dot(expand_ref[:, :NE], yw_ref[:NE, :],
                     preferred_element_type=f32)
             + jnp.dot(expand_ref[:, NE_lanes:], tk,
                       preferred_element_type=f32))                        # (BNE, H)
        y = jnp.where(y > 0, y, 0.02 * y)                                  # LeakyReLU

        s = (jnp.dot(y, wk3_ref[...], preferred_element_type=f32)
             + bias_ref[:, :K])                                            # (BNE, K)

        # Softmax over the E edges of each (batch, station) group: shifting by
        # the global per-column max is equivalent within every group; the
        # clamped denominator below keeps a fully-underflowed group finite.
        # TODO(synk): use a true per-group max if logit spreads can exceed ~80.
        ex = jnp.exp(s - jnp.max(s, axis=0, keepdims=True))                # (BNE, K)

        # Neighbor aggregation for the whole tile via the block-diagonal link.
        lx = jnp.dot(link_ref[...], x_b, preferred_element_type=f32)       # (BNE, C)

        # Row-wise Kronecker product ex ⊗ lx (k-major / c-minor) with 0/1
        # expansion GEMMs — keeps everything 2-D, no in-kernel reshapes.
        ex_rep = jnp.dot(ex, r_ref[:K, :], preferred_element_type=f32)     # (BNE, KC)
        lx_rep = jnp.dot(lx, r_ref[K_pad:, :], preferred_element_type=f32) # (BNE, KC)
        kron = ex_rep * lx_rep

        # Edge-group sums; d_rep = gsum @ ex_rep fuses the old
        # (gsum @ ex) @ r_k chain into a single GEMM (identical math).
        gsum = gsum_ref[...]
        u = jnp.dot(gsum, kron, preferred_element_type=f32)                # (BN, KC)
        d_rep = jnp.dot(gsum, ex_rep, preferred_element_type=f32)          # (BN, KC)
        z = u / jnp.maximum(d_rep, 1e-30)

        # gc layer: wide lane-dense GEMM + diagonal-block mask, then one
        # grouping GEMM folds the N station rows of each batch element into a
        # single unmasked (BT, N*G) store.
        out_big = jnp.dot(z, wm_ref[:KC, :], preferred_element_type=f32)   # (BN, NG)
        masked = out_big * wm_ref[KC_pad:, :]
        row = jnp.dot(gsel_ref[...], masked, preferred_element_type=f32)   # (BT, NG)
        o_ref[...] = jnp.maximum(row + bias_ref[:, K_lanes:], 0.0)

    # advisory cost estimate (keeps XLA's scheduler honest around this call)
    flops_tile = 2 * (BT * T * H + BNE * NE * H + BNE * BT * H + BNE * H * K
                      + BNE * BN * C + BNE * K * KC + BNE * C * KC
                      + 2 * BN * BNE * KC + BN * KC * NG + BT * BN * NG)
    bytes_tile = 4 * (BT * T + BN * C + BT * NG
                      + yw_pack.size + w_k3_t.size + bias_pack.size
                      + expand_pack.size + link_big.size + r_pack.size
                      + gsum_b.size + wm_pack.size + gsel.size)
    cost = pl.CostEstimate(flops=num_tiles * flops_tile,
                           transcendentals=num_tiles * (BNE * K + BN * KC),
                           bytes_accessed=num_tiles * bytes_tile)

    const = lambda i: (0, 0)
    out = pl.pallas_call(
        kernel,
        out_shape=jax.ShapeDtypeStruct((B, NG), f32),
        grid_spec=pltpu.PrefetchScalarGridSpec(
            num_scalar_prefetch=0,
            grid=(num_tiles,),
            in_specs=[
                pl.BlockSpec((BT, T), lambda i: (i, 0)),        # t
                pl.BlockSpec((BN, C), lambda i: (i, 0)),        # x (row-flattened)
                pl.BlockSpec(yw_pack.shape, const),             # [y0 ; W_t2k^T]
                pl.BlockSpec((H, K), const),                    # W_k3^T
                pl.BlockSpec(bias_pack.shape, const),           # [b_k3 | b_gc]
                pl.BlockSpec(expand_pack.shape, const),         # [tile | repeat]
                pl.BlockSpec(link_big.shape, const),            # blockdiag(link)
                pl.BlockSpec(r_pack.shape, const),              # [r_k ; r_c]
                pl.BlockSpec(gsum_b.shape, const),              # edge group-sum
                pl.BlockSpec(wm_pack.shape, const),             # [W_gc wide ; mask]
                pl.BlockSpec(gsel.shape, const),                # batch-row collapse
            ],
            out_specs=pl.BlockSpec((BT, NG), lambda i: (i, 0)),
        ),
        compiler_params=pltpu.CompilerParams(
            dimension_semantics=("parallel",)),
        cost_estimate=cost,
    )(t, x2, yw_pack, w_k3_t, bias_pack, expand_pack, link_big, r_pack,
      gsum_b, wm_pack, gsel)
    return out


def ndsgcn_reference(ef, link, t, x, params):
    """Pure-JAX transcription of the torch forward (for verification)."""
    W_e2k, b_e2k, W_t2k, W_k3, b_k3, W_gc, b_gc = params
    B = x.shape[0]
    N = ef.shape[0]
    y = jnp.einsum('nef,hf->neh', ef, W_e2k) + b_e2k                 # (N,E,H)
    tk = jnp.einsum('bt,ht->bh', t, W_t2k)                           # (B,H)
    y = y[:, :, None, :] + tk[None, None, :, :]                      # (N,E,B,H)
    y = jnp.transpose(y, (2, 0, 1, 3))                               # (B,N,E,H)
    y = jnp.where(y > 0, y, 0.02 * y)                                # LeakyReLU
    s = jnp.einsum('bneh,kh->bnek', y, W_k3) + b_k3                  # (B,N,E,K)
    s = jax.nn.softmax(s, axis=-2)                                   # over E
    a = jnp.einsum('bnek,nem->bknm', s, link)                        # (B,K,N,M)
    z = jnp.einsum('bknm,bmc->bnkc', a, x)                           # (B,N,K,C)
    z = z.reshape(B, N, -1)                                          # (B,N,K*C)
    out = jnp.maximum(jnp.einsum('bnf,gf->bng', z, W_gc) + b_gc, 0.0)
    return out.reshape(B, -1)


if __name__ == "__main__":
    # Small, forward-consistent sizes:
    # B=batch, N=num_stats, E=edges/station, F=edge_feature_dims,
    # H=decf_mlp_hidden[0], T=num_temp, K=weight_function_dim,
    # C=local_cnn_dims, G=gnn_dims[0]   (N*G = 128 -> lane-dense output)
    B, N, E, F, H, T, K, C, G = 2, 8, 4, 6, 16, 5, 4, 8, 16

    key = jax.random.PRNGKey(0)
    ks = jax.random.split(key, 12)

    lim_e0 = 1.0 / np.sqrt(F)
    lim_e1 = 1.0 / np.sqrt(T)
    lim_e2 = 1.0 / np.sqrt(H)
    lim_gc = 1.0 / np.sqrt(K * C)

    W_e2k = jax.random.uniform(ks[0], (H, F), jnp.float32, -lim_e0, lim_e0)
    b_e2k = jax.random.uniform(ks[1], (H,), jnp.float32, -lim_e0, lim_e0)
    W_t2k = jax.random.uniform(ks[2], (H, T), jnp.float32, -lim_e1, lim_e1)
    W_k3 = jax.random.uniform(ks[3], (K, H), jnp.float32, -lim_e2, lim_e2)
    b_k3 = jax.random.uniform(ks[4], (K,), jnp.float32, -lim_e2, lim_e2)
    W_gc = jax.random.uniform(ks[5], (G, K * C), jnp.float32, -lim_gc, lim_gc)
    b_gc = jax.random.uniform(ks[6], (G,), jnp.float32, -lim_gc, lim_gc)
    params = (W_e2k, b_e2k, W_t2k, W_k3, b_k3, W_gc, b_gc)

    # Deterministic stand-ins for the .npy files (link / ef) and the inputs.
    ef = jax.random.normal(ks[7], (N, E, F), jnp.float32)
    link = jax.random.bernoulli(ks[8], 0.5, (N, E, N)).astype(jnp.float32)
    t = jax.random.normal(ks[9], (B, T), jnp.float32)
    x = jax.random.normal(ks[10], (B, N, C), jnp.float32)

    out = jax.block_until_ready(ndsgcn_forward(ef, link, t, x, params))

    with jax.default_matmul_precision("highest"):
        ref = jax.block_until_ready(ndsgcn_reference(ef, link, t, x, params))

    assert out.shape == (B, N * G)
    np.testing.assert_allclose(np.asarray(out), np.asarray(ref),
                               rtol=1e-2, atol=1e-2)
    print("KERNEL_OK")
</pallas_src>

<mosaic_0001>
module attributes {stable_mosaic.version = 11 : i64} {
  func.func @kernel(%arg0: i32, %arg1: memref<2x5xf32, #tpu.memory_space<vmem>>, %arg2: memref<16x8xf32, #tpu.memory_space<vmem>>, %arg3: memref<37x16xf32, #tpu.memory_space<vmem>>, %arg4: memref<16x4xf32, #tpu.memory_space<vmem>>, %arg5: memref<1x256xf32, #tpu.memory_space<vmem>>, %arg6: memref<64x130xf32, #tpu.memory_space<vmem>>, %arg7: memref<64x16xf32, #tpu.memory_space<vmem>>, %arg8: memref<16x32xf32, #tpu.memory_space<vmem>>, %arg9: memref<16x64xf32, #tpu.memory_space<vmem>>, %arg10: memref<48x128xf32, #tpu.memory_space<vmem>>, %arg11: memref<2x16xf32, #tpu.memory_space<vmem>>, %arg12: memref<2x128xf32, #tpu.memory_space<vmem>>) attributes {dimension_semantics = [#tpu.dimension_semantics<parallel>], iteration_bounds = array<i64: 1>, scalar_prefetch = 0 : i64, scratch_operands = 0 : i64, tpu.core_type = #tpu.core_type<tc>, window_params = [{transform_indices = @transform_0, window_bounds = array<i64: 2, 5>}, {transform_indices = @transform_1, window_bounds = array<i64: 16, 8>}, {pipeline_mode = #tpu.pipeline_mode<synchronous>, transform_indices = @transform_2, window_bounds = array<i64: 37, 16>}, {pipeline_mode = #tpu.pipeline_mode<synchronous>, transform_indices = @transform_3, window_bounds = array<i64: 16, 4>}, {pipeline_mode = #tpu.pipeline_mode<synchronous>, transform_indices = @transform_4, window_bounds = array<i64: 1, 256>}, {pipeline_mode = #tpu.pipeline_mode<synchronous>, transform_indices = @transform_5, window_bounds = array<i64: 64, 130>}, {pipeline_mode = #tpu.pipeline_mode<synchronous>, transform_indices = @transform_6, window_bounds = array<i64: 64, 16>}, {pipeline_mode = #tpu.pipeline_mode<synchronous>, transform_indices = @transform_7, window_bounds = array<i64: 16, 32>}, {pipeline_mode = #tpu.pipeline_mode<synchronous>, transform_indices = @transform_8, window_bounds = array<i64: 16, 64>}, {pipeline_mode = #tpu.pipeline_mode<synchronous>, transform_indices = @transform_9, window_bounds = array<i64: 48, 128>}, {pipeline_mode = #tpu.pipeline_mode<synchronous>, transform_indices = @transform_10, window_bounds = array<i64: 2, 16>}, {transform_indices = @transform_11, window_bounds = array<i64: 2, 128>}]} {
    %c0 = arith.constant 0 : index
    %c0_0 = arith.constant 0 : index
    %0 = vector.load %arg1[%c0, %c0_0] : memref<2x5xf32, #tpu.memory_space<vmem>>, vector<2x5xf32>
    %c0_1 = arith.constant 0 : index
    %c0_2 = arith.constant 0 : index
    %1 = vector.load %arg2[%c0_1, %c0_2] : memref<16x8xf32, #tpu.memory_space<vmem>>, vector<16x8xf32>
    %c32 = arith.constant 32 : index
    %c0_3 = arith.constant 0 : index
    %2 = vector.load %arg3[%c32, %c0_3] : memref<37x16xf32, #tpu.memory_space<vmem>>, vector<5x16xf32>
    %cst = arith.constant dense<0.000000e+00> : vector<2x16xf32>
    %3 = tpu.matmul %0, %2, %cst {dimension_numbers = #tpu.dot_dimension_numbers<[1], [0], [0], [1], [0, 0, 1, 1], [], []>} : vector<2x5xf32>, vector<5x16xf32>, vector<2x16xf32> -> vector<2x16xf32>
    %c0_4 = arith.constant 0 : index
    %c0_5 = arith.constant 0 : index
    %4 = vector.load %arg6[%c0_4, %c0_5] : memref<64x130xf32, #tpu.memory_space<vmem>>, vector<64x32xf32>
    %c0_6 = arith.constant 0 : index
    %c0_7 = arith.constant 0 : index
    %5 = vector.load %arg3[%c0_6, %c0_7] : memref<37x16xf32, #tpu.memory_space<vmem>>, vector<32x16xf32>
    %cst_8 = arith.constant dense<0.000000e+00> : vector<64x16xf32>
    %6 = tpu.matmul %4, %5, %cst_8 {dimension_numbers = #tpu.dot_dimension_numbers<[1], [0], [0], [1], [0, 0, 1, 1], [], []>} : vector<64x32xf32>, vector<32x16xf32>, vector<64x16xf32> -> vector<64x16xf32>
    %c0_9 = arith.constant 0 : index
    %c128 = arith.constant 128 : index
    %7 = vector.load %arg6[%c0_9, %c128] : memref<64x130xf32, #tpu.memory_space<vmem>>, vector<64x2xf32>
    %cst_10 = arith.constant dense<0.000000e+00> : vector<64x16xf32>
    %8 = tpu.matmul %7, %3, %cst_10 {dimension_numbers = #tpu.dot_dimension_numbers<[1], [0], [0], [1], [0, 0, 1, 1], [], []>} : vector<64x2xf32>, vector<2x16xf32>, vector<64x16xf32> -> vector<64x16xf32>
    %9 = arith.addf %6, %8 : vector<64x16xf32>
    %cst_11 = arith.constant 0.000000e+00 : f32
    %10 = vector.broadcast %cst_11 : f32 to vector<64x16xf32>
    %11 = arith.cmpf ogt, %9, %10 : vector<64x16xf32>
    %cst_12 = arith.constant 2.000000e-02 : f32
    %12 = vector.broadcast %cst_12 : f32 to vector<64x16xf32>
    %13 = arith.mulf %12, %9 : vector<64x16xf32>
    %14 = arith.select %11, %9, %13 : vector<64x16xi1>, vector<64x16xf32>
    %c0_13 = arith.constant 0 : index
    %c0_14 = arith.constant 0 : index
    %15 = vector.load %arg4[%c0_13, %c0_14] : memref<16x4xf32, #tpu.memory_space<vmem>>, vector<16x4xf32>
    %cst_15 = arith.constant dense<0.000000e+00> : vector<64x4xf32>
    %16 = tpu.matmul %14, %15, %cst_15 {dimension_numbers = #tpu.dot_dimension_numbers<[1], [0], [0], [1], [0, 0, 1, 1], [], []>} : vector<64x16xf32>, vector<16x4xf32>, vector<64x4xf32> -> vector<64x4xf32>
    %c0_16 = arith.constant 0 : index
    %c0_17 = arith.constant 0 : index
    %17 = vector.load %arg5[%c0_16, %c0_17] : memref<1x256xf32, #tpu.memory_space<vmem>>, vector<1x4xf32>
    %18 = vector.broadcast %17 : vector<1x4xf32> to vector<64x4xf32>
    %19 = arith.addf %16, %18 : vector<64x4xf32>
    %cst_18 = arith.constant dense<0xFF800000> : vector<4xf32>
    %20 = vector.multi_reduction <maximumf>, %19, %cst_18 [0] : vector<64x4xf32> to vector<4xf32>
    %21 = vector.shape_cast %20 : vector<4xf32> to vector<1x4xf32>
    %22 = vector.broadcast %21 : vector<1x4xf32> to vector<64x4xf32>
    %23 = arith.subf %19, %22 : vector<64x4xf32>
    %24 = math.exp %23 : vector<64x4xf32>
    %c0_19 = arith.constant 0 : index
    %c0_20 = arith.constant 0 : index
    %25 = vector.load %arg7[%c0_19, %c0_20] : memref<64x16xf32, #tpu.memory_space<vmem>>, vector<64x16xf32>
    %cst_21 = arith.constant dense<0.000000e+00> : vector<64x8xf32>
    %26 = tpu.matmul %25, %1, %cst_21 {dimension_numbers = #tpu.dot_dimension_numbers<[1], [0], [0], [1], [0, 0, 1, 1], [], []>} : vector<64x16xf32>, vector<16x8xf32>, vector<64x8xf32> -> vector<64x8xf32>
    %c0_22 = arith.constant 0 : index
    %c0_23 = arith.constant 0 : index
    %27 = vector.load %arg8[%c0_22, %c0_23] : memref<16x32xf32, #tpu.memory_space<vmem>>, vector<4x32xf32>
    %cst_24 = arith.constant dense<0.000000e+00> : vector<64x32xf32>
    %28 = tpu.matmul %24, %27, %cst_24 {dimension_numbers = #tpu.dot_dimension_numbers<[1], [0], [0], [1], [0, 0, 1, 1], [], []>} : vector<64x4xf32>, vector<4x32xf32>, vector<64x32xf32> -> vector<64x32xf32>
    %c8 = arith.constant 8 : index
    %c0_25 = arith.constant 0 : index
    %29 = vector.load %arg8[%c8, %c0_25] : memref<16x32xf32, #tpu.memory_space<vmem>>, vector<8x32xf32>
    %cst_26 = arith.constant dense<0.000000e+00> : vector<64x32xf32>
    %30 = tpu.matmul %26, %29, %cst_26 {dimension_numbers = #tpu.dot_dimension_numbers<[1], [0], [0], [1], [0, 0, 1, 1], [], []>} : vector<64x8xf32>, vector<8x32xf32>, vector<64x32xf32> -> vector<64x32xf32>
    %31 = arith.mulf %28, %30 : vector<64x32xf32>
    %c0_27 = arith.constant 0 : index
    %c0_28 = arith.constant 0 : index
    %32 = vector.load %arg9[%c0_27, %c0_28] : memref<16x64xf32, #tpu.memory_space<vmem>>, vector<16x64xf32>
    %cst_29 = arith.constant dense<0.000000e+00> : vector<16x32xf32>
    %33 = tpu.matmul %32, %31, %cst_29 {dimension_numbers = #tpu.dot_dimension_numbers<[1], [0], [0], [1], [0, 0, 1, 1], [], []>} : vector<16x64xf32>, vector<64x32xf32>, vector<16x32xf32> -> vector<16x32xf32>
    %cst_30 = arith.constant dense<0.000000e+00> : vector<16x32xf32>
    %34 = tpu.matmul %32, %28, %cst_30 {dimension_numbers = #tpu.dot_dimension_numbers<[1], [0], [0], [1], [0, 0, 1, 1], [], []>} : vector<16x64xf32>, vector<64x32xf32>, vector<16x32xf32> -> vector<16x32xf32>
    %cst_31 = arith.constant 1.000000e-30 : f32
    %35 = vector.broadcast %cst_31 : f32 to vector<16x32xf32>
    %36 = arith.maximumf %34, %35 : vector<16x32xf32>
    %37 = arith.divf %33, %36 : vector<16x32xf32>
    %c0_32 = arith.constant 0 : index
    %c0_33 = arith.constant 0 : index
    %38 = vector.load %arg10[%c0_32, %c0_33] : memref<48x128xf32, #tpu.memory_space<vmem>>, vector<32x128xf32>
    %cst_34 = arith.constant dense<0.000000e+00> : vector<16x128xf32>
    %39 = tpu.matmul %37, %38, %cst_34 {dimension_numbers = #tpu.dot_dimension_numbers<[1], [0], [0], [1], [0, 0, 1, 1], [], []>} : vector<16x32xf32>, vector<32x128xf32>, vector<16x128xf32> -> vector<16x128xf32>
    %c32_35 = arith.constant 32 : index
    %c0_36 = arith.constant 0 : index
    %40 = vector.load %arg10[%c32_35, %c0_36] : memref<48x128xf32, #tpu.memory_space<vmem>>, vector<16x128xf32>
    %41 = arith.mulf %39, %40 : vector<16x128xf32>
    %c0_37 = arith.constant 0 : index
    %c0_38 = arith.constant 0 : index
    %42 = vector.load %arg11[%c0_37, %c0_38] : memref<2x16xf32, #tpu.memory_space<vmem>>, vector<2x16xf32>
    %cst_39 = arith.constant dense<0.000000e+00> : vector<2x128xf32>
    %43 = tpu.matmul %42, %41, %cst_39 {dimension_numbers = #tpu.dot_dimension_numbers<[1], [0], [0], [1], [0, 0, 1, 1], [], []>} : vector<2x16xf32>, vector<16x128xf32>, vector<2x128xf32> -> vector<2x128xf32>
    %c0_40 = arith.constant 0 : index
    %c128_41 = arith.constant 128 : index
    %44 = vector.load %arg5[%c0_40, %c128_41] : memref<1x256xf32, #tpu.memory_space<vmem>>, vector<1x128xf32>
    %45 = vector.broadcast %44 : vector<1x128xf32> to vector<2x128xf32>
    %46 = arith.addf %43, %45 : vector<2x128xf32>
    %cst_42 = arith.constant 0.000000e+00 : f32
    %47 = vector.broadcast %cst_42 : f32 to vector<2x128xf32>
    %48 = arith.maximumf %46, %47 : vector<2x128xf32>
    %c0_43 = arith.constant 0 : index
    %c0_44 = arith.constant 0 : index
    %49 = vector.load %arg12[%c0_43, %c0_44] : memref<2x128xf32, #tpu.memory_space<vmem>>, vector<2x128xf32>
    tpu.vector_store %arg12[%c0_43, %c0_44], %48 {strides = array<i32>} : memref<2x128xf32, #tpu.memory_space<vmem>>, vector<2x128xf32>,
    return
  }
  func.func @transform_0(%arg0: i32) -> (i32, i32) {
    %c0_i32 = arith.constant 0 : i32
    %c0_i32_0 = arith.constant 0 : i32
    return %arg0, %c0_i32 : i32, i32
  }
  func.func @transform_1(%arg0: i32) -> (i32, i32) {
    %c0_i32 = arith.constant 0 : i32
    %c0_i32_0 = arith.constant 0 : i32
    return %arg0, %c0_i32 : i32, i32
  }
  func.func @transform_2(%arg0: i32) -> (i32, i32) {
    %c0_i32 = arith.constant 0 : i32
    %c0_i32_0 = arith.constant 0 : i32
    %c0_i32_1 = arith.constant 0 : i32
    return %c0_i32, %c0_i32_0 : i32, i32
  }
  func.func @transform_3(%arg0: i32) -> (i32, i32) {
    %c0_i32 = arith.constant 0 : i32
    %c0_i32_0 = arith.constant 0 : i32
    %c0_i32_1 = arith.constant 0 : i32
    return %c0_i32, %c0_i32_0 : i32, i32
  }
  func.func @transform_4(%arg0: i32) -> (i32, i32) {
    %c0_i32 = arith.constant 0 : i32
    %c0_i32_0 = arith.constant 0 : i32
    %c0_i32_1 = arith.constant 0 : i32
    return %c0_i32, %c0_i32_0 : i32, i32
  }
  func.func @transform_5(%arg0: i32) -> (i32, i32) {
    %c0_i32 = arith.constant 0 : i32
    %c0_i32_0 = arith.constant 0 : i32
    %c0_i32_1 = arith.constant 0 : i32
    return %c0_i32, %c0_i32_0 : i32, i32
  }
  func.func @transform_6(%arg0: i32) -> (i32, i32) {
    %c0_i32 = arith.constant 0 : i32
    %c0_i32_0 = arith.constant 0 : i32
    %c0_i32_1 = arith.constant 0 : i32
    return %c0_i32, %c0_i32_0 : i32, i32
  }
  func.func @transform_7(%arg0: i32) -> (i32, i32) {
    %c0_i32 = arith.constant 0 : i32
    %c0_i32_0 = arith.constant 0 : i32
    %c0_i32_1 = arith.constant 0 : i32
    return %c0_i32, %c0_i32_0 : i32, i32
  }
  func.func @transform_8(%arg0: i32) -> (i32, i32) {
    %c0_i32 = arith.constant 0 : i32
    %c0_i32_0 = arith.constant 0 : i32
    %c0_i32_1 = arith.constant 0 : i32
    return %c0_i32, %c0_i32_0 : i32, i32
  }
  func.func @transform_9(%arg0: i32) -> (i32, i32) {
    %c0_i32 = arith.constant 0 : i32
    %c0_i32_0 = arith.constant 0 : i32
    %c0_i32_1 = arith.constant 0 : i32
    return %c0_i32, %c0_i32_0 : i32, i32
  }
  func.func @transform_10(%arg0: i32) -> (i32, i32) {
    %c0_i32 = arith.constant 0 : i32
    %c0_i32_0 = arith.constant 0 : i32
    %c0_i32_1 = arith.constant 0 : i32
    return %c0_i32, %c0_i32_0 : i32, i32
  }
  func.func @transform_11(%arg0: i32) -> (i32, i32) {
    %c0_i32 = arith.constant 0 : i32
    %c0_i32_0 = arith.constant 0 : i32
    return %arg0, %c0_i32 : i32, i32
  }
}

</mosaic_0001>

<llo_original>
// kernel: tpu_custom_call.1
$region0: #{tpu_custom_call.1}
  #allocation0 [shape = 'u32[]', space=smem, size = 0x4, offset = 0x4, fixed_abs, tag = 'smem constant byte address 0x4 - core index']
  #allocation1 [shape = 'u32[144,128]{1,0:T(1,128)}', space=vmem, size = 0x12000, scoped, tag = 'internal scratch']
  %s0 = inlined_call_operand.vmem [shape: f32[2,5], index: 0, kind: input, shape index: {}]
  %s1 = inlined_call_operand.vmem [shape: f32[16,8], index: 1, kind: input, shape index: {}]
  %s2 = inlined_call_operand.vmem [shape: f32[37,16], index: 2, kind: input, shape index: {}]
  %s3 = inlined_call_operand.vmem [shape: f32[16,4], index: 3, kind: input, shape index: {}]
  %s4 = inlined_call_operand.hbm [shape: f32[1,256], index: 4, kind: input, shape index: {}]
  %s5 = inlined_call_operand.vmem [shape: f32[64,130], index: 5, kind: input, shape index: {}]
  %s6 = inlined_call_operand.vmem [shape: f32[64,16], index: 6, kind: input, shape index: {}]
  %s7 = inlined_call_operand.hbm [shape: f32[16,32], index: 7, kind: input, shape index: {}]
  %s8 = inlined_call_operand.vmem [shape: f32[16,64], index: 8, kind: input, shape index: {}]
  %s9 = inlined_call_operand.vmem [shape: f32[48,128], index: 9, kind: input, shape index: {}]
  %s10 = inlined_call_operand.vmem [shape: f32[2,16], index: 10, kind: input, shape index: {}]
  %s11 = inlined_call_operand.hbm [shape: f32[2,128], index: 11, kind: output, shape index: {}]
  %s12 = sld [smem:[#allocation0]]
  $region62: #{tpu_custom_call.1} parent=0
    _
  %s14 = ssub.s32 1, %s12
  %s15 = scalar_select 0, %s14, %s12
  $region1: #{tpu_custom_call.1} parent=0
    #allocation2 [shape = 'u8[1024]{0}', space=vmem, size = 0x400, scoped, tag = 'input window, operand 4, single buffered']
    #allocation3 [shape = 's32[1]{0}', space=sflag, size = 0x4, scoped, tag = 'scoped memory for tpu_custom_call.1']
    #allocation4 [shape = 's32[1]{0}', space=sflag, size = 0x4, scoped, tag = 'scoped memory for tpu_custom_call.1']
    #allocation5 [shape = 'u8[8192]{0}', space=vmem, size = 0x2000, scoped, tag = 'input window, operand 7, single buffered']
    #allocation6 [shape = 's32[1]{0}', space=sflag, size = 0x4, scoped, tag = 'scoped memory for tpu_custom_call.1']
    #allocation7 [shape = 'u8[1024]{0}', space=vmem, size = 0x400, scoped, tag = 'output window, operand 0, single buffered']
    %16 = vsyncpa [#allocation3], 0
    %17 = vsyncpa [#allocation6], 0
    %18 = vsyncpa [#allocation4], 0
    // Predicated region
    $region2: #{tpu_custom_call.1} parent=1 // pred_check
      _
    $region3: #{tpu_custom_call.1} parent=1 // pred_check_branch
      %20 = sbr.rel (0) target = $region5
    $region4: #{tpu_custom_call.1} parent=1 // pred_region
      _
    $region5: #{tpu_custom_call.1} parent=1 // pred_fallthru
      _
    // Predicated region
    $region6: #{tpu_custom_call.1} parent=1 // pred_check
      _
    $region7: #{tpu_custom_call.1} parent=1 // pred_check_branch
      %22 = sbr.rel (0) target = $region9
    $region8: #{tpu_custom_call.1} parent=1 // pred_region
      _
    $region9: #{tpu_custom_call.1} parent=1 // pred_fallthru
      _
    // Predicated region
    $region10: #{tpu_custom_call.1} parent=1 // pred_check
      _
    $region11: #{tpu_custom_call.1} parent=1 // pred_check_branch
      %24 = sbr.rel (0) target = $region13
    $region12: #{tpu_custom_call.1} parent=1 // pred_region
      _
    $region13: #{tpu_custom_call.1} parent=1 // pred_fallthru
      _
    // Predicated region
    $region14: #{tpu_custom_call.1} parent=1 // pred_check
      _
    $region15: #{tpu_custom_call.1} parent=1 // pred_check_branch
      %26 = sbr.rel (0) target = $region17
    $region16: #{tpu_custom_call.1} parent=1 // pred_region
      _
    $region17: #{tpu_custom_call.1} parent=1 // pred_fallthru
      _
    // Predicated region
    $region18: #{tpu_custom_call.1} parent=1 // pred_check
      _
    $region19: #{tpu_custom_call.1} parent=1 // pred_check_branch
      %28 = sbr.rel (0) target = $region21
    $region20: #{tpu_custom_call.1} parent=1 // pred_region
      %s30 = ssub.s32 32, 32
      %31 = vsyncadd [#allocation3], %s30
      %s33 = sshll.u32 [#allocation2], 4
      %s34 = int_to_ptr.vmem [resolvable:$true] %s33
      %36 = dma.hbm_to_vmem [thread:$0]  %s4, 32, %s34, [#allocation3]
    $region21: #{tpu_custom_call.1} parent=1 // pred_fallthru
      _
    // Predicated region
    $region22: #{tpu_custom_call.1} parent=1 // pred_check
      _
    $region23: #{tpu_custom_call.1} parent=1 // pred_check_branch
      %38 = sbr.rel (0) target = $region25
    $region24: #{tpu_custom_call.1} parent=1 // pred_region
      _
    $region25: #{tpu_custom_call.1} parent=1 // pred_fallthru
      _
    // Predicated region
    $region26: #{tpu_custom_call.1} parent=1 // pred_check
      _
    $region27: #{tpu_custom_call.1} parent=1 // pred_check_branch
      %40 = sbr.rel (0) target = $region29
    $region28: #{tpu_custom_call.1} parent=1 // pred_region
      _
    $region29: #{tpu_custom_call.1} parent=1 // pred_fallthru
      _
    // Predicated region
    $region30: #{tpu_custom_call.1} parent=1 // pred_check
      _
    $region31: #{tpu_custom_call.1} parent=1 // pred_check_branch
      %42 = sbr.rel (0) target = $region33
    $region32: #{tpu_custom_call.1} parent=1 // pred_region
      %s44 = ssub.s32 256, 256
      %45 = vsyncadd [#allocation6], %s44
      %s46 = sshll.u32 [#allocation5], 4
      %s47 = int_to_ptr.vmem [resolvable:$true] %s46
      %52 = dma.hbm_to_vmem [thread:$0]  %s7, 256, %s47, [#allocation6], 128, 128, 8
    $region33: #{tpu_custom_call.1} parent=1 // pred_fallthru
      _
    // Predicated region
    $region34: #{tpu_custom_call.1} parent=1 // pred_check
      _
    $region35: #{tpu_custom_call.1} parent=1 // pred_check_branch
      %54 = sbr.rel (0) target = $region37
    $region36: #{tpu_custom_call.1} parent=1 // pred_region
      _
    $region37: #{tpu_custom_call.1} parent=1 // pred_fallthru
      _
    // Predicated region
    $region38: #{tpu_custom_call.1} parent=1 // pred_check
      _
    $region39: #{tpu_custom_call.1} parent=1 // pred_check_branch
      %56 = sbr.rel (0) target = $region41
    $region40: #{tpu_custom_call.1} parent=1 // pred_region
      _
    $region41: #{tpu_custom_call.1} parent=1 // pred_fallthru
      _
    // Predicated region
    $region42: #{tpu_custom_call.1} parent=1 // pred_check
      _
    $region43: #{tpu_custom_call.1} parent=1 // pred_check_branch
      %58 = sbr.rel (0) target = $region45
    $region44: #{tpu_custom_call.1} parent=1 // pred_region
      _
    $region45: #{tpu_custom_call.1} parent=1 // pred_fallthru
      _
    // Predicated region
    $region46: #{tpu_custom_call.1} parent=1 // pred_check
      _
    $region47: #{tpu_custom_call.1} parent=1 // pred_check_branch
      %60 = sbr.rel (0) target = $region49
    $region48: #{tpu_custom_call.1} parent=1 // pred_region
      %61 = dma.done [#allocation3], 32
    $region49: #{tpu_custom_call.1} parent=1 // pred_fallthru
      _
    // Predicated region
    $region50: #{tpu_custom_call.1} parent=1 // pred_check
      _
    $region51: #{tpu_custom_call.1} parent=1 // pred_check_branch
      %63 = sbr.rel (0) target = $region53
    $region52: #{tpu_custom_call.1} parent=1 // pred_region
      %64 = dma.done [#allocation6], 256
    $region53: #{tpu_custom_call.1} parent=1 // pred_fallthru
      _
    %v65 = vld [vmem:[%s0] sm:$0x3]
    %v66 = vld [vmem:[%s1] sm:$0xff]
    %v67 = vld [vmem:[%s1 + $0x8] sm:$0xff]
    %v68 = vld [vmem:[%s2 + $0x20] sm:$0x1f]
    %vm69 = vcmask 39936
    %v71 = vsel %vm69, %v65, 0
    %vm73 = vcmask 1044480
    %v75 = vsel %vm73, %v68, 0
    %77 = vmatprep.subr.mxu0 0.0
    %78 = vmatpush1.msra.mxu0 0.0
    %79 = vmatprep.subr.mxu0 0.0
    %80 = vmatpush1.msra.mxu0 0.0
    %81 = vmatprep.subr.mxu0 0.0
    %82 = vmatpush1.msra.mxu0 0.0
    %83 = vmatprep.subr.mxu0 0.0
    %84 = vmatpush1.msra.mxu0 0.0
    %85 = vmatprep.subr.mxu0 0.0
    %86 = vmatpush1.msra.mxu0 0.0
    %87 = vmatprep.subr.mxu0 0.0
    %88 = vmatpush1.msra.mxu0 0.0
    %89 = vmatprep.subr.mxu0 0.0
    %90 = vmatpush1.msra.mxu0 0.0
    %91 = vmatprep.subr.mxu0 0.0
    %92 = vmatpush1.msra.mxu0 0.0
    %93 = vmatprep.subr.mxu0 0.0
    %94 = vmatpush1.msra.mxu0 0.0
    %95 = vmatprep.subr.mxu0 0.0
    %96 = vmatpush1.msra.mxu0 0.0
    %97 = vmatprep.subr.mxu0 0.0
    %98 = vmatpush1.msra.mxu0 0.0
    %99 = vmatprep.subr.mxu0 0.0
    %100 = vmatpush1.msra.mxu0 0.0
    %101 = vmatprep.subr.mxu0 0.0
    %102 = vmatpush1.msra.mxu0 0.0
    %103 = vmatprep.subr.mxu0 0.0
    %104 = vmatpush1.msra.mxu0 0.0
    %105 = vmatprep.subr.mxu0 0.0
    %106 = vmatpush1.msra.mxu0 0.0
    %107 = vmatprep.subr.mxu0 0.0
    %108 = vmatpush1.msra.mxu0 %v75
    %109 = vmatprep.subr.mxu0 0.0
    %110 = vmatpush2.msra.mxu0 0.0
    %111 = vmatprep.subr.mxu0 0.0
    %112 = vmatpush2.msra.mxu0 0.0
    %113 = vmatprep.subr.mxu0 0.0
    %114 = vmatpush2.msra.mxu0 0.0
    %115 = vmatprep.subr.mxu0 0.0
    %116 = vmatpush2.msra.mxu0 0.0
    %117 = vmatprep.subr.mxu0 0.0
    %118 = vmatpush2.msra.mxu0 0.0
    %119 = vmatprep.subr.mxu0 0.0
    %120 = vmatpush2.msra.mxu0 0.0
    %121 = vmatprep.subr.mxu0 0.0
    %122 = vmatpush2.msra.mxu0 0.0
    %123 = vmatprep.subr.mxu0 0.0
    %124 = vmatpush2.msra.mxu0 0.0
    %125 = vmatprep.subr.mxu0 0.0
    %126 = vmatpush2.msra.mxu0 0.0
    %127 = vmatprep.subr.mxu0 0.0
    %128 = vmatpush2.msra.mxu0 0.0
    %129 = vmatprep.subr.mxu0 0.0
    %130 = vmatpush2.msra.mxu0 0.0
    %131 = vmatprep.subr.mxu0 0.0
    %132 = vmatpush2.msra.mxu0 0.0
    %133 = vmatprep.subr.mxu0 0.0
    %134 = vmatpush2.msra.mxu0 0.0
    %135 = vmatprep.subr.mxu0 0.0
    %136 = vmatpush2.msra.mxu0 0.0
    %137 = vmatprep.subr.mxu0 0.0
    %138 = vmatpush2.msra.mxu0 0.0
    %139 = vmatprep.subr.mxu0 0.0
    %140 = vmatpush2.msra.mxu0 0.0
    %141 = vmatprep.mubr.f32.mxu0 0.0
    %142 = vmatmul.mubr.f32.gmra.mxu0 %v71
    %v143 = vpop.f32.mrf.mxu0
    %v144 = vadd.f32 0.0, %v143
    %v145 = vpop.f32.mrf.mxu0
    %146 = vdwg.mxu0
    %v147 = vld [vmem:[%s5] sm:$0xff]
    %v148 = vld [vmem:[%s5 + $0x10] sm:$0xff]
    %v149 = vld [vmem:[%s5 + $0x20] sm:$0xff]
    %v150 = vld [vmem:[%s5 + $0x30] sm:$0xff]
    %v151 = vld [vmem:[%s5 + $0x40] sm:$0xff]
    %v152 = vld [vmem:[%s5 + $0x50] sm:$0xff]
    %v153 = vld [vmem:[%s5 + $0x60] sm:$0xff]
    %v154 = vld [vmem:[%s5 + $0x70] sm:$0xff]
    %v155 = vld [vmem:[%s2] sm:$0xff]
    %v156 = vld [vmem:[%s2 + $0x8] sm:$0xff]
    %v157 = vld [vmem:[%s2 + $0x10] sm:$0xff]
    %v158 = vld [vmem:[%s2 + $0x18] sm:$0xff]
    %v159 = vld [vmem:[%s5 + $0x8] sm:$0xff]
    %v160 = vld [vmem:[%s5 + $0x18] sm:$0xff]
    %v161 = vld [vmem:[%s5 + $0x28] sm:$0xff]
    %v162 = vld [vmem:[%s5 + $0x38] sm:$0xff]
    %v163 = vld [vmem:[%s5 + $0x48] sm:$0xff]
    %v164 = vld [vmem:[%s5 + $0x58] sm:$0xff]
    %v165 = vld [vmem:[%s5 + $0x68] sm:$0xff]
    %v166 = vld [vmem:[%s5 + $0x78] sm:$0xff]
    %vm167 = vcmask 15360
    %v169 = vsel %vm167, %v159, 0
    %v172 = vsel %vm167, %v160, 0
    %v175 = vsel %vm167, %v161, 0
    %v178 = vsel %vm167, %v162, 0
    %v181 = vsel %vm167, %v163, 0
    %v184 = vsel %vm167, %v164, 0
    %v187 = vsel %vm167, %v165, 0
    %v190 = vsel %vm167, %v166, 0
    %vm192 = vcmask 1041408
    %v194 = vsel %vm192, %v144, 0
    %196 = vmatprep.subr.mxu0 0.0
    %197 = vmatpush1.msra.mxu0 0.0
    %198 = vmatprep.subr.mxu0 0.0
    %199 = vmatpush1.msra.mxu0 0.0
    %200 = vmatprep.subr.mxu0 0.0
    %201 = vmatpush1.msra.mxu0 0.0
    %202 = vmatprep.subr.mxu0 0.0
    %203 = vmatpush1.msra.mxu0 0.0
    %204 = vmatprep.subr.mxu0 0.0
    %205 = vmatpush1.msra.mxu0 0.0
    %206 = vmatprep.subr.mxu0 0.0
    %207 = vmatpush1.msra.mxu0 0.0
    %208 = vmatprep.subr.mxu0 0.0
    %209 = vmatpush1.msra.mxu0 0.0
    %210 = vmatprep.subr.mxu0 0.0
    %211 = vmatpush1.msra.mxu0 0.0
    %212 = vmatprep.subr.mxu0 0.0
    %213 = vmatpush1.msra.mxu0 0.0
    %214 = vmatprep.subr.mxu0 0.0
    %215 = vmatpush1.msra.mxu0 0.0
    %216 = vmatprep.subr.mxu0 0.0
    %217 = vmatpush1.msra.mxu0 0.0
    %218 = vmatprep.subr.mxu0 0.0
    %219 = vmatpush1.msra.mxu0 0.0
    %220 = vmatprep.subr.mxu0 0.0
    %221 = vmatpush1.msra.mxu0 0.0
    %222 = vmatprep.subr.mxu0 0.0
    %223 = vmatpush1.msra.mxu0 0.0
    %224 = vmatprep.subr.mxu0 0.0
    %225 = vmatpush1.msra.mxu0 0.0
    %226 = vmatprep.subr.mxu0 0.0
    %227 = vmatpush1.msra.mxu0 %v194
    %228 = vmatprep.subr.mxu0 0.0
    %229 = vmatpush2.msra.mxu0 0.0
    %230 = vmatprep.subr.mxu0 0.0
    %231 = vmatpush2.msra.mxu0 0.0
    %232 = vmatprep.subr.mxu0 0.0
    %233 = vmatpush2.msra.mxu0 0.0
    %234 = vmatprep.subr.mxu0 0.0
    %235 = vmatpush2.msra.mxu0 0.0
    %236 = vmatprep.subr.mxu0 0.0
    %237 = vmatpush2.msra.mxu0 0.0
    %238 = vmatprep.subr.mxu0 0.0
    %239 = vmatpush2.msra.mxu0 0.0
    %240 = vmatprep.subr.mxu0 0.0
    %241 = vmatpush2.msra.mxu0 0.0
    %242 = vmatprep.subr.mxu0 0.0
    %243 = vmatpush2.msra.mxu0 0.0
    %244 = vmatprep.subr.mxu0 0.0
    %245 = vmatpush2.msra.mxu0 0.0
    %246 = vmatprep.subr.mxu0 0.0
    %247 = vmatpush2.msra.mxu0 0.0
    %248 = vmatprep.subr.mxu0 0.0
    %249 = vmatpush2.msra.mxu0 0.0
    %250 = vmatprep.subr.mxu0 0.0
    %251 = vmatpush2.msra.mxu0 0.0
    %252 = vmatprep.subr.mxu0 0.0
    %253 = vmatpush2.msra.mxu0 0.0
    %254 = vmatprep.subr.mxu0 0.0
    %255 = vmatpush2.msra.mxu0 0.0
    %256 = vmatprep.subr.mxu0 0.0
    %257 = vmatpush2.msra.mxu0 0.0
    %258 = vmatprep.subr.mxu0 0.0
    %259 = vmatpush2.msra.mxu0 0.0
    %260 = vmatprep.mubr.f32.mxu0 0.0
    %261 = vmatmul.mubr.f32.gmra.mxu0 %v169
    %v262 = vpop.f32.mrf.mxu0
    %v263 = vadd.f32 0.0, %v262
    %v264 = vpop.f32.mrf.mxu0
    %265 = vmatprep.mubr.f32.mxu0 0.0
    %266 = vmatmul.mubr.f32.gmra.mxu0 %v172
    %v267 = vpop.f32.mrf.mxu0
    %v268 = vadd.f32 0.0, %v267
    %v269 = vpop.f32.mrf.mxu0
    %270 = vmatprep.mubr.f32.mxu0 0.0
    %271 = vmatmul.mubr.f32.gmra.mxu0 %v175
    %v272 = vpop.f32.mrf.mxu0
    %v273 = vadd.f32 0.0, %v272
    %v274 = vpop.f32.mrf.mxu0
    %275 = vmatprep.mubr.f32.mxu0 0.0
    %276 = vmatmul.mubr.f32.gmra.mxu0 %v178
    %v277 = vpop.f32.mrf.mxu0
    %v278 = vadd.f32 0.0, %v277
    %v279 = vpop.f32.mrf.mxu0
    %280 = vmatprep.mubr.f32.mxu0 0.0
    %281 = vmatmul.mubr.f32.gmra.mxu0 %v181
    %v282 = vpop.f32.mrf.mxu0
    %v283 = vadd.f32 0.0, %v282
    %v284 = vpop.f32.mrf.mxu0
    %285 = vmatprep.mubr.f32.mxu0 0.0
    %286 = vmatmul.mubr.f32.gmra.mxu0 %v184
    %v287 = vpop.f32.mrf.mxu0
    %v288 = vadd.f32 0.0, %v287
    %v289 = vpop.f32.mrf.mxu0
    %290 = vmatprep.mubr.f32.mxu0 0.0
    %291 = vmatmul.mubr.f32.gmra.mxu0 %v187
    %v292 = vpop.f32.mrf.mxu0
    %v293 = vadd.f32 0.0, %v292
    %v294 = vpop.f32.mrf.mxu0
    %295 = vmatprep.mubr.f32.mxu0 0.0
    %296 = vmatmul.mubr.f32.gmra.mxu0 %v190
    %v297 = vpop.f32.mrf.mxu0
    %v298 = vadd.f32 0.0, %v297
    %v299 = vpop.f32.mrf.mxu0
    %300 = vdwg.mxu0
    %vm301 = vcmask 261120
    %v303 = vsel %vm301, %v147, 0
    %v306 = vsel %vm301, %v148, 0
    %v309 = vsel %vm301, %v149, 0
    %v312 = vsel %vm301, %v150, 0
    %v315 = vsel %vm301, %v151, 0
    %v318 = vsel %vm301, %v152, 0
    %v321 = vsel %vm301, %v153, 0
    %v324 = vsel %vm301, %v154, 0
    %326 = vmatprep.subr.mxu0 0.0
    %327 = vmatpush1.msra.mxu0 0.0
    %328 = vmatprep.subr.mxu0 0.0
    %329 = vmatpush1.msra.mxu0 0.0
    %330 = vmatprep.subr.mxu0 0.0
    %331 = vmatpush1.msra.mxu0 0.0
    %332 = vmatprep.subr.mxu0 0.0
    %333 = vmatpush1.msra.mxu0 0.0
    %334 = vmatprep.subr.mxu0 0.0
    %335 = vmatpush1.msra.mxu0 0.0
    %336 = vmatprep.subr.mxu0 0.0
    %337 = vmatpush1.msra.mxu0 0.0
    %338 = vmatprep.subr.mxu0 0.0
    %339 = vmatpush1.msra.mxu0 0.0
    %340 = vmatprep.subr.mxu0 0.0
    %341 = vmatpush1.msra.mxu0 0.0
    %342 = vmatprep.subr.mxu0 0.0
    %343 = vmatpush1.msra.mxu0 0.0
    %344 = vmatprep.subr.mxu0 0.0
    %345 = vmatpush1.msra.mxu0 0.0
    %346 = vmatprep.subr.mxu0 0.0
    %347 = vmatpush1.msra.mxu0 0.0
    %348 = vmatprep.subr.mxu0 0.0
    %349 = vmatpush1.msra.mxu0 0.0
    %350 = vmatprep.subr.mxu0 0.0
    %351 = vmatpush1.msra.mxu0 %v158
    %352 = vmatprep.subr.mxu0 0.0
    %353 = vmatpush1.msra.mxu0 %v157
    %354 = vmatprep.subr.mxu0 0.0
    %355 = vmatpush1.msra.mxu0 %v156
    %356 = vmatprep.subr.mxu0 0.0
    %357 = vmatpush1.msra.mxu0 %v155
    %358 = vmatprep.subr.mxu0 0.0
    %359 = vmatpush2.msra.mxu0 0.0
    %360 = vmatprep.subr.mxu0 0.0
    %361 = vmatpush2.msra.mxu0 0.0
    %362 = vmatprep.subr.mxu0 0.0
    %363 = vmatpush2.msra.mxu0 0.0
    %364 = vmatprep.subr.mxu0 0.0
    %365 = vmatpush2.msra.mxu0 0.0
    %366 = vmatprep.subr.mxu0 0.0
    %367 = vmatpush2.msra.mxu0 0.0
    %368 = vmatprep.subr.mxu0 0.0
    %369 = vmatpush2.msra.mxu0 0.0
    %370 = vmatprep.subr.mxu0 0.0
    %371 = vmatpush2.msra.mxu0 0.0
    %372 = vmatprep.subr.mxu0 0.0
    %373 = vmatpush2.msra.mxu0 0.0
    %374 = vmatprep.subr.mxu0 0.0
    %375 = vmatpush2.msra.mxu0 0.0
    %376 = vmatprep.subr.mxu0 0.0
    %377 = vmatpush2.msra.mxu0 0.0
    %378 = vmatprep.subr.mxu0 0.0
    %379 = vmatpush2.msra.mxu0 0.0
    %380 = vmatprep.subr.mxu0 0.0
    %381 = vmatpush2.msra.mxu0 0.0
    %382 = vmatprep.subr.mxu0 0.0
    %383 = vmatpush2.msra.mxu0 0.0
    %384 = vmatprep.subr.mxu0 0.0
    %385 = vmatpush2.msra.mxu0 0.0
    %386 = vmatprep.subr.mxu0 0.0
    %387 = vmatpush2.msra.mxu0 0.0
    %388 = vmatprep.subr.mxu0 0.0
    %389 = vmatpush2.msra.mxu0 0.0
    %390 = vmatprep.mubr.f32.mxu0 0.0
    %391 = vmatmul.mubr.f32.gmra.mxu0 %v303
    %v392 = vpop.f32.mrf.mxu0
    %v393 = vadd.f32 %v263, %v392
    %v394 = vpop.f32.mrf.mxu0
    %395 = vmatprep.mubr.f32.mxu0 0.0
    %396 = vmatmul.mubr.f32.gmra.mxu0 %v306
    %v397 = vpop.f32.mrf.mxu0
    %v398 = vadd.f32 %v268, %v397
    %v399 = vpop.f32.mrf.mxu0
    %400 = vmatprep.mubr.f32.mxu0 0.0
    %401 = vmatmul.mubr.f32.gmra.mxu0 %v309
    %v402 = vpop.f32.mrf.mxu0
    %v403 = vadd.f32 %v273, %v402
    %v404 = vpop.f32.mrf.mxu0
    %405 = vmatprep.mubr.f32.mxu0 0.0
    %406 = vmatmul.mubr.f32.gmra.mxu0 %v312
    %v407 = vpop.f32.mrf.mxu0
    %v408 = vadd.f32 %v278, %v407
    %v409 = vpop.f32.mrf.mxu0
    %410 = vmatprep.mubr.f32.mxu0 0.0
    %411 = vmatmul.mubr.f32.gmra.mxu0 %v315
    %v412 = vpop.f32.mrf.mxu0
    %v413 = vadd.f32 %v283, %v412
    %v414 = vpop.f32.mrf.mxu0
    %415 = vmatprep.mubr.f32.mxu0 0.0
    %416 = vmatmul.mubr.f32.gmra.mxu0 %v318
    %v417 = vpop.f32.mrf.mxu0
    %v418 = vadd.f32 %v288, %v417
    %v419 = vpop.f32.mrf.mxu0
    %420 = vmatprep.mubr.f32.mxu0 0.0
    %421 = vmatmul.mubr.f32.gmra.mxu0 %v321
    %v422 = vpop.f32.mrf.mxu0
    %v423 = vadd.f32 %v293, %v422
    %v424 = vpop.f32.mrf.mxu0
    %425 = vmatprep.mubr.f32.mxu0 0.0
    %426 = vmatmul.mubr.f32.gmra.mxu0 %v324
    %v427 = vpop.f32.mrf.mxu0
    %v428 = vadd.f32 %v298, %v427
    %v429 = vpop.f32.mrf.mxu0
    %430 = vdwg.mxu0
    %vm431 = vcmp.gt.f32.partialorder %v393, 0.0
    %vm432 = vcmp.gt.f32.partialorder %v398, 0.0
    %vm433 = vcmp.gt.f32.partialorder %v403, 0.0
    %vm434 = vcmp.gt.f32.partialorder %v408, 0.0
    %vm435 = vcmp.gt.f32.partialorder %v413, 0.0
    %vm436 = vcmp.gt.f32.partialorder %v418, 0.0
    %vm437 = vcmp.gt.f32.partialorder %v423, 0.0
    %vm438 = vcmp.gt.f32.partialorder %v428, 0.0
    %v439 = vmul.f32 %v393, 0.02
    %v440 = vmul.f32 %v398, 0.02
    %v441 = vmul.f32 %v403, 0.02
    %v442 = vmul.f32 %v408, 0.02
    %v443 = vmul.f32 %v413, 0.02
    %v444 = vmul.f32 %v418, 0.02
    %v445 = vmul.f32 %v423, 0.02
    %v446 = vmul.f32 %v428, 0.02
    %v447 = vsel %vm431, %v393, %v439
    %v448 = vsel %vm432, %v398, %v440
    %v449 = vsel %vm433, %v403, %v441
    %v450 = vsel %vm434, %v408, %v442
    %v451 = vsel %vm435, %v413, %v443
    %v452 = vsel %vm436, %v418, %v444
    %v453 = vsel %vm437, %v423, %v445
    %v454 = vsel %vm438, %v428, %v446
    %v455 = vld [vmem:[%s3] sm:$0xff]
    %v456 = vld [vmem:[%s3 + $0x8] sm:$0xff]
    %v457 = vld [vmem:[#allocation2] sm:$0x1]
    %v459 = vlaneseq
    %v460 = vshrl.u32 %v459, 7
    %v461 = vsub.s32 0, %v460
    %v462 = vrot.slane %v457, %v461
    %vm464 = vcmask 130048
    %v466 = vsel %vm464, %v447, 0
    %v469 = vsel %vm464, %v448, 0
    %v472 = vsel %vm464, %v449, 0
    %v475 = vsel %vm464, %v450, 0
    %v478 = vsel %vm464, %v451, 0
    %v481 = vsel %vm464, %v452, 0
    %v484 = vsel %vm464, %v453, 0
    %v487 = vsel %vm464, %v454, 0
    %489 = vmatprep.subr.mxu0 0.0
    %490 = vmatpush1.msra.mxu0 0.0
    %491 = vmatprep.subr.mxu0 0.0
    %492 = vmatpush1.msra.mxu0 0.0
    %493 = vmatprep.subr.mxu0 0.0
    %494 = vmatpush1.msra.mxu0 0.0
    %495 = vmatprep.subr.mxu0 0.0
    %496 = vmatpush1.msra.mxu0 0.0
    %497 = vmatprep.subr.mxu0 0.0
    %498 = vmatpush1.msra.mxu0 0.0
    %499 = vmatprep.subr.mxu0 0.0
    %500 = vmatpush1.msra.mxu0 0.0
    %501 = vmatprep.subr.mxu0 0.0
    %502 = vmatpush1.msra.mxu0 0.0
    %503 = vmatprep.subr.mxu0 0.0
    %504 = vmatpush1.msra.mxu0 0.0
    %505 = vmatprep.subr.mxu0 0.0
    %506 = vmatpush1.msra.mxu0 0.0
    %507 = vmatprep.subr.mxu0 0.0
    %508 = vmatpush1.msra.mxu0 0.0
    %509 = vmatprep.subr.mxu0 0.0
    %510 = vmatpush1.msra.mxu0 0.0
    %511 = vmatprep.subr.mxu0 0.0
    %512 = vmatpush1.msra.mxu0 0.0
    %513 = vmatprep.subr.mxu0 0.0
    %514 = vmatpush1.msra.mxu0 0.0
    %515 = vmatprep.subr.mxu0 0.0
    %516 = vmatpush1.msra.mxu0 0.0
    %517 = vmatprep.subr.mxu0 0.0
    %518 = vmatpush1.msra.mxu0 %v456
    %519 = vmatprep.subr.mxu0 0.0
    %520 = vmatpush1.msra.mxu0 %v455
    %521 = vmatprep.subr.mxu0 0.0
    %522 = vmatpush2.msra.mxu0 0.0
    %523 = vmatprep.subr.mxu0 0.0
    %524 = vmatpush2.msra.mxu0 0.0
    %525 = vmatprep.subr.mxu0 0.0
    %526 = vmatpush2.msra.mxu0 0.0
    %527 = vmatprep.subr.mxu0 0.0
    %528 = vmatpush2.msra.mxu0 0.0
    %529 = vmatprep.subr.mxu0 0.0
    %530 = vmatpush2.msra.mxu0 0.0
    %531 = vmatprep.subr.mxu0 0.0
    %532 = vmatpush2.msra.mxu0 0.0
    %533 = vmatprep.subr.mxu0 0.0
    %534 = vmatpush2.msra.mxu0 0.0
    %535 = vmatprep.subr.mxu0 0.0
    %536 = vmatpush2.msra.mxu0 0.0
    %537 = vmatprep.subr.mxu0 0.0
    %538 = vmatpush2.msra.mxu0 0.0
    %539 = vmatprep.subr.mxu0 0.0
    %540 = vmatpush2.msra.mxu0 0.0
    %541 = vmatprep.subr.mxu0 0.0
    %542 = vmatpush2.msra.mxu0 0.0
    %543 = vmatprep.subr.mxu0 0.0
    %544 = vmatpush2.msra.mxu0 0.0
    %545 = vmatprep.subr.mxu0 0.0
    %546 = vmatpush2.msra.mxu0 0.0
    %547 = vmatprep.subr.mxu0 0.0
    %548 = vmatpush2.msra.mxu0 0.0
    %549 = vmatprep.subr.mxu0 0.0
    %550 = vmatpush2.msra.mxu0 0.0
    %551 = vmatprep.subr.mxu0 0.0
    %552 = vmatpush2.msra.mxu0 0.0
    %553 = vmatprep.mubr.f32.mxu0 0.0
    %554 = vmatmul.mubr.f32.gmra.mxu0 %v466
    %v555 = vpop.f32.mrf.mxu0
    %v556 = vadd.f32 %v462, %v555
    %v557 = vpop.f32.mrf.mxu0
    %558 = vmatprep.mubr.f32.mxu0 0.0
    %559 = vmatmul.mubr.f32.gmra.mxu0 %v469
    %v560 = vpop.f32.mrf.mxu0
    %v561 = vadd.f32 %v462, %v560
    %v562 = vpop.f32.mrf.mxu0
    %563 = vmatprep.mubr.f32.mxu0 0.0
    %564 = vmatmul.mubr.f32.gmra.mxu0 %v472
    %v565 = vpop.f32.mrf.mxu0
    %v566 = vadd.f32 %v462, %v565
    %v567 = vpop.f32.mrf.mxu0
    %568 = vmatprep.mubr.f32.mxu0 0.0
    %569 = vmatmul.mubr.f32.gmra.mxu0 %v475
    %v570 = vpop.f32.mrf.mxu0
    %v571 = vadd.f32 %v462, %v570
    %v572 = vpop.f32.mrf.mxu0
    %573 = vmatprep.mubr.f32.mxu0 0.0
    %574 = vmatmul.mubr.f32.gmra.mxu0 %v478
    %v575 = vpop.f32.mrf.mxu0
    %v576 = vadd.f32 %v462, %v575
    %v577 = vpop.f32.mrf.mxu0
    %578 = vmatprep.mubr.f32.mxu0 0.0
    %579 = vmatmul.mubr.f32.gmra.mxu0 %v481
    %v580 = vpop.f32.mrf.mxu0
    %v581 = vadd.f32 %v462, %v580
    %v582 = vpop.f32.mrf.mxu0
    %583 = vmatprep.mubr.f32.mxu0 0.0
    %584 = vmatmul.mubr.f32.gmra.mxu0 %v484
    %v585 = vpop.f32.mrf.mxu0
    %v586 = vadd.f32 %v462, %v585
    %v587 = vpop.f32.mrf.mxu0
    %588 = vmatprep.mubr.f32.mxu0 0.0
    %589 = vmatmul.mubr.f32.gmra.mxu0 %v487
    %v590 = vpop.f32.mrf.mxu0
    %v591 = vadd.f32 %v462, %v590
    %v592 = vpop.f32.mrf.mxu0
    %593 = vdwg.mxu0
    %vm594 = vcmask 31744
    %v595 = vsel %vm594, %v556, -inf
    %v596 = vsel %vm594, %v561, -inf
    %v597 = vsel %vm594, %v566, -inf
    %v598 = vsel %vm594, %v571, -inf
    %v599 = vsel %vm594, %v576, -inf
    %v600 = vmax.f32 %v595, %v599
    %v601 = vsel %vm594, %v581, -inf
    %v602 = vmax.f32 %v596, %v601
    %v603 = vsel %vm594, %v586, -inf
    %v604 = vmax.f32 %v597, %v603
    %v605 = vsel %vm594, %v591, -inf
    %v606 = vmax.f32 %v598, %v605
    %v607 = vmax.f32 %v600, %v602
    %v608 = vmax.f32 %v604, %v606
    %v609 = vmax.f32 %v607, %v608
    %v610 = vrot.slane %v609, 4
    %v611 = vmax.f32 %v609, %v610
    %v612 = vrot.slane %v611, 2
    %v613 = vmax.f32 %v611, %v612
    %v614 = vrot.slane %v613, 1
    %v615 = vmax.f32 %v613, %v614
    %v616 = vsub.f32 %v556, %v615
    %v617 = vsub.f32 %v561, %v615
    %v618 = vsub.f32 %v566, %v615
    %v619 = vsub.f32 %v571, %v615
    %v620 = vsub.f32 %v576, %v615
    %v621 = vsub.f32 %v581, %v615
    %v622 = vsub.f32 %v586, %v615
    %v623 = vsub.f32 %v591, %v615
    %v624 = vmul.f32 %v616, 1.442695
    %v625 = vpow.pop %v624
    %v626 = vmul.f32 %v617, 1.442695
    %v627 = vpow.pop %v626
    %v628 = vmul.f32 %v618, 1.442695
    %v629 = vpow.pop %v628
    %v630 = vmul.f32 %v619, 1.442695
    %v631 = vpow.pop %v630
    %v632 = vmul.f32 %v620, 1.442695
    %v633 = vpow.pop %v632
    %v634 = vmul.f32 %v621, 1.442695
    %v635 = vpow.pop %v634
    %v636 = vmul.f32 %v622, 1.442695
    %v637 = vpow.pop %v636
    %v638 = vmul.f32 %v623, 1.442695
    %v639 = vpow.pop %v638
    %v640 = vld [vmem:[%s6] sm:$0xff]
    %v641 = vld [vmem:[%s6 + $0x8] sm:$0xff]
    %v642 = vld [vmem:[%s6 + $0x10] sm:$0xff]
    %v643 = vld [vmem:[%s6 + $0x18] sm:$0xff]
    %v644 = vld [vmem:[%s6 + $0x20] sm:$0xff]
    %v645 = vld [vmem:[%s6 + $0x28] sm:$0xff]
    %v646 = vld [vmem:[%s6 + $0x30] sm:$0xff]
    %v647 = vld [vmem:[%s6 + $0x38] sm:$0xff]
    %v649 = vsel %vm464, %v640, 0
    %v652 = vsel %vm464, %v641, 0
    %v655 = vsel %vm464, %v642, 0
    %v658 = vsel %vm464, %v643, 0
    %v661 = vsel %vm464, %v644, 0
    %v664 = vsel %vm464, %v645, 0
    %v667 = vsel %vm464, %v646, 0
    %v670 = vsel %vm464, %v647, 0
    %672 = vmatprep.subr.mxu0 0.0
    %673 = vmatpush1.msra.mxu0 0.0
    %674 = vmatprep.subr.mxu0 0.0
    %675 = vmatpush1.msra.mxu0 0.0
    %676 = vmatprep.subr.mxu0 0.0
    %677 = vmatpush1.msra.mxu0 0.0
    %678 = vmatprep.subr.mxu0 0.0
    %679 = vmatpush1.msra.mxu0 0.0
    %680 = vmatprep.subr.mxu0 0.0
    %681 = vmatpush1.msra.mxu0 0.0
    %682 = vmatprep.subr.mxu0 0.0
    %683 = vmatpush1.msra.mxu0 0.0
    %684 = vmatprep.subr.mxu0 0.0
    %685 = vmatpush1.msra.mxu0 0.0
    %686 = vmatprep.subr.mxu0 0.0
    %687 = vmatpush1.msra.mxu0 0.0
    %688 = vmatprep.subr.mxu0 0.0
    %689 = vmatpush1.msra.mxu0 0.0
    %690 = vmatprep.subr.mxu0 0.0
    %691 = vmatpush1.msra.mxu0 0.0
    %692 = vmatprep.subr.mxu0 0.0
    %693 = vmatpush1.msra.mxu0 0.0
    %694 = vmatprep.subr.mxu0 0.0
    %695 = vmatpush1.msra.mxu0 0.0
    %696 = vmatprep.subr.mxu0 0.0
    %697 = vmatpush1.msra.mxu0 0.0
    %698 = vmatprep.subr.mxu0 0.0
    %699 = vmatpush1.msra.mxu0 0.0
    %700 = vmatprep.subr.mxu0 0.0
    %701 = vmatpush1.msra.mxu0 %v67
    %702 = vmatprep.subr.mxu0 0.0
    %703 = vmatpush1.msra.mxu0 %v66
    %704 = vmatprep.subr.mxu0 0.0
    %705 = vmatpush2.msra.mxu0 0.0
    %706 = vmatprep.subr.mxu0 0.0
    %707 = vmatpush2.msra.mxu0 0.0
    %708 = vmatprep.subr.mxu0 0.0
    %709 = vmatpush2.msra.mxu0 0.0
    %710 = vmatprep.subr.mxu0 0.0
    %711 = vmatpush2.msra.mxu0 0.0
    %712 = vmatprep.subr.mxu0 0.0
    %713 = vmatpush2.msra.mxu0 0.0
    %714 = vmatprep.subr.mxu0 0.0
    %715 = vmatpush2.msra.mxu0 0.0
    %716 = vmatprep.subr.mxu0 0.0
    %717 = vmatpush2.msra.mxu0 0.0
    %718 = vmatprep.subr.mxu0 0.0
    %719 = vmatpush2.msra.mxu0 0.0
    %720 = vmatprep.subr.mxu0 0.0
    %721 = vmatpush2.msra.mxu0 0.0
    %722 = vmatprep.subr.mxu0 0.0
    %723 = vmatpush2.msra.mxu0 0.0
    %724 = vmatprep.subr.mxu0 0.0
    %725 = vmatpush2.msra.mxu0 0.0
    %726 = vmatprep.subr.mxu0 0.0
    %727 = vmatpush2.msra.mxu0 0.0
    %728 = vmatprep.subr.mxu0 0.0
    %729 = vmatpush2.msra.mxu0 0.0
    %730 = vmatprep.subr.mxu0 0.0
    %731 = vmatpush2.msra.mxu0 0.0
    %732 = vmatprep.subr.mxu0 0.0
    %733 = vmatpush2.msra.mxu0 0.0
    %734 = vmatprep.subr.mxu0 0.0
    %735 = vmatpush2.msra.mxu0 0.0
    %736 = vmatprep.mubr.f32.mxu0 0.0
    %737 = vmatmul.mubr.f32.gmra.mxu0 %v649
    %v738 = vpop.f32.mrf.mxu0
    %v739 = vadd.f32 0.0, %v738
    %v740 = vpop.f32.mrf.mxu0
    %741 = vmatprep.mubr.f32.mxu0 0.0
    %742 = vmatmul.mubr.f32.gmra.mxu0 %v652
    %v743 = vpop.f32.mrf.mxu0
    %v744 = vadd.f32 0.0, %v743
    %v745 = vpop.f32.mrf.mxu0
    %746 = vmatprep.mubr.f32.mxu0 0.0
    %747 = vmatmul.mubr.f32.gmra.mxu0 %v655
    %v748 = vpop.f32.mrf.mxu0
    %v749 = vadd.f32 0.0, %v748
    %v750 = vpop.f32.mrf.mxu0
    %751 = vmatprep.mubr.f32.mxu0 0.0
    %752 = vmatmul.mubr.f32.gmra.mxu0 %v658
    %v753 = vpop.f32.mrf.mxu0
    %v754 = vadd.f32 0.0, %v753
    %v755 = vpop.f32.mrf.mxu0
    %756 = vmatprep.mubr.f32.mxu0 0.0
    %757 = vmatmul.mubr.f32.gmra.mxu0 %v661
    %v758 = vpop.f32.mrf.mxu0
    %v759 = vadd.f32 0.0, %v758
    %v760 = vpop.f32.mrf.mxu0
    %761 = vmatprep.mubr.f32.mxu0 0.0
    %762 = vmatmul.mubr.f32.gmra.mxu0 %v664
    %v763 = vpop.f32.mrf.mxu0
    %v764 = vadd.f32 0.0, %v763
    %v765 = vpop.f32.mrf.mxu0
    %766 = vmatprep.mubr.f32.mxu0 0.0
    %767 = vmatmul.mubr.f32.gmra.mxu0 %v667
    %v768 = vpop.f32.mrf.mxu0
    %v769 = vadd.f32 0.0, %v768
    %v770 = vpop.f32.mrf.mxu0
    %771 = vmatprep.mubr.f32.mxu0 0.0
    %772 = vmatmul.mubr.f32.gmra.mxu0 %v670
    %v773 = vpop.f32.mrf.mxu0
    %v774 = vadd.f32 0.0, %v773
    %v775 = vpop.f32.mrf.mxu0
    %776 = vdwg.mxu0
    %v777 = vld [vmem:[#allocation5] sm:$0xf]
    %v779 = vsel %vm594, %v625, 0
    %v782 = vsel %vm594, %v627, 0
    %v785 = vsel %vm594, %v629, 0
    %v788 = vsel %vm594, %v631, 0
    %v791 = vsel %vm594, %v633, 0
    %v794 = vsel %vm594, %v635, 0
    %v797 = vsel %vm594, %v637, 0
    %v800 = vsel %vm594, %v639, 0
    %vm802 = vcmask 1043456
    %v804 = vsel %vm802, %v777, 0
    %806 = vmatprep.subr.mxu0 0.0
    %807 = vmatpush1.msra.mxu0 0.0
    %808 = vmatprep.subr.mxu0 0.0
    %809 = vmatpush1.msra.mxu0 0.0
    %810 = vmatprep.subr.mxu0 0.0
    %811 = vmatpush1.msra.mxu0 0.0
    %812 = vmatprep.subr.mxu0 0.0
    %813 = vmatpush1.msra.mxu0 0.0
    %814 = vmatprep.subr.mxu0 0.0
    %815 = vmatpush1.msra.mxu0 0.0
    %816 = vmatprep.subr.mxu0 0.0
    %817 = vmatpush1.msra.mxu0 0.0
    %818 = vmatprep.subr.mxu0 0.0
    %819 = vmatpush1.msra.mxu0 0.0
    %820 = vmatprep.subr.mxu0 0.0
    %821 = vmatpush1.msra.mxu0 0.0
    %822 = vmatprep.subr.mxu0 0.0
    %823 = vmatpush1.msra.mxu0 0.0
    %824 = vmatprep.subr.mxu0 0.0
    %825 = vmatpush1.msra.mxu0 0.0
    %826 = vmatprep.subr.mxu0 0.0
    %827 = vmatpush1.msra.mxu0 0.0
    %828 = vmatprep.subr.mxu0 0.0
    %829 = vmatpush1.msra.mxu0 0.0
    %830 = vmatprep.subr.mxu0 0.0
    %831 = vmatpush1.msra.mxu0 0.0
    %832 = vmatprep.subr.mxu0 0.0
    %833 = vmatpush1.msra.mxu0 0.0
    %834 = vmatprep.subr.mxu0 0.0
    %835 = vmatpush1.msra.mxu0 0.0
    %836 = vmatprep.subr.mxu0 0.0
    %837 = vmatpush1.msra.mxu0 %v804
    %838 = vmatprep.subr.mxu0 0.0
    %839 = vmatpush2.msra.mxu0 0.0
    %840 = vmatprep.subr.mxu0 0.0
    %841 = vmatpush2.msra.mxu0 0.0
    %842 = vmatprep.subr.mxu0 0.0
    %843 = vmatpush2.msra.mxu0 0.0
    %844 = vmatprep.subr.mxu0 0.0
    %845 = vmatpush2.msra.mxu0 0.0
    %846 = vmatprep.subr.mxu0 0.0
    %847 = vmatpush2.msra.mxu0 0.0
    %848 = vmatprep.subr.mxu0 0.0
    %849 = vmatpush2.msra.mxu0 0.0
    %850 = vmatprep.subr.mxu0 0.0
    %851 = vmatpush2.msra.mxu0 0.0
    %852 = vmatprep.subr.mxu0 0.0
    %853 = vmatpush2.msra.mxu0 0.0
    %854 = vmatprep.subr.mxu0 0.0
    %855 = vmatpush2.msra.mxu0 0.0
    %856 = vmatprep.subr.mxu0 0.0
    %857 = vmatpush2.msra.mxu0 0.0
    %858 = vmatprep.subr.mxu0 0.0
    %859 = vmatpush2.msra.mxu0 0.0
    %860 = vmatprep.subr.mxu0 0.0
    %861 = vmatpush2.msra.mxu0 0.0
    %862 = vmatprep.subr.mxu0 0.0
    %863 = vmatpush2.msra.mxu0 0.0
    %864 = vmatprep.subr.mxu0 0.0
    %865 = vmatpush2.msra.mxu0 0.0
    %866 = vmatprep.subr.mxu0 0.0
    %867 = vmatpush2.msra.mxu0 0.0
    %868 = vmatprep.subr.mxu0 0.0
    %869 = vmatpush2.msra.mxu0 0.0
    %870 = vmatprep.mubr.f32.mxu0 0.0
    %871 = vmatmul.mubr.f32.gmra.mxu0 %v779
    %v872 = vpop.f32.mrf.mxu0
    %v873 = vadd.f32 0.0, %v872
    %v874 = vpop.f32.mrf.mxu0
    %875 = vmatprep.mubr.f32.mxu0 0.0
    %876 = vmatmul.mubr.f32.gmra.mxu0 %v782
    %v877 = vpop.f32.mrf.mxu0
    %v878 = vadd.f32 0.0, %v877
    %v879 = vpop.f32.mrf.mxu0
    %880 = vmatprep.mubr.f32.mxu0 0.0
    %881 = vmatmul.mubr.f32.gmra.mxu0 %v785
    %v882 = vpop.f32.mrf.mxu0
    %v883 = vadd.f32 0.0, %v882
    %v884 = vpop.f32.mrf.mxu0
    %885 = vmatprep.mubr.f32.mxu0 0.0
    %886 = vmatmul.mubr.f32.gmra.mxu0 %v788
    %v887 = vpop.f32.mrf.mxu0
    %v888 = vadd.f32 0.0, %v887
    %v889 = vpop.f32.mrf.mxu0
    %890 = vmatprep.mubr.f32.mxu0 0.0
    %891 = vmatmul.mubr.f32.gmra.mxu0 %v791
    %v892 = vpop.f32.mrf.mxu0
    %v893 = vadd.f32 0.0, %v892
    %v894 = vpop.f32.mrf.mxu0
    %895 = vmatprep.mubr.f32.mxu0 0.0
    %896 = vmatmul.mubr.f32.gmra.mxu0 %v794
    %v897 = vpop.f32.mrf.mxu0
    %v898 = vadd.f32 0.0, %v897
    %v899 = vpop.f32.mrf.mxu0
    %900 = vmatprep.mubr.f32.mxu0 0.0
    %901 = vmatmul.mubr.f32.gmra.mxu0 %v797
    %v902 = vpop.f32.mrf.mxu0
    %v903 = vadd.f32 0.0, %v902
    %v904 = vpop.f32.mrf.mxu0
    %905 = vmatprep.mubr.f32.mxu0 0.0
    %906 = vmatmul.mubr.f32.gmra.mxu0 %v800
    %v907 = vpop.f32.mrf.mxu0
    %v908 = vadd.f32 0.0, %v907
    %v909 = vpop.f32.mrf.mxu0
    %910 = vdwg.mxu0
    %v911 = vld [vmem:[#allocation5 + $0x8] sm:$0xff]
    %vm912 = vcmask 64512
    %v914 = vsel %vm912, %v739, 0
    %v917 = vsel %vm912, %v744, 0
    %v920 = vsel %vm912, %v749, 0
    %v923 = vsel %vm912, %v754, 0
    %v926 = vsel %vm912, %v759, 0
    %v929 = vsel %vm912, %v764, 0
    %v932 = vsel %vm912, %v769, 0
    %v935 = vsel %vm912, %v774, 0
    %937 = vmatprep.subr.mxu0 0.0
    %938 = vmatpush1.msra.mxu0 0.0
    %939 = vmatprep.subr.mxu0 0.0
    %940 = vmatpush1.msra.mxu0 0.0
    %941 = vmatprep.subr.mxu0 0.0
    %942 = vmatpush1.msra.mxu0 0.0
    %943 = vmatprep.subr.mxu0 0.0
    %944 = vmatpush1.msra.mxu0 0.0
    %945 = vmatprep.subr.mxu0 0.0
    %946 = vmatpush1.msra.mxu0 0.0
    %947 = vmatprep.subr.mxu0 0.0
    %948 = vmatpush1.msra.mxu0 0.0
    %949 = vmatprep.subr.mxu0 0.0
    %950 = vmatpush1.msra.mxu0 0.0
    %951 = vmatprep.subr.mxu0 0.0
    %952 = vmatpush1.msra.mxu0 0.0
    %953 = vmatprep.subr.mxu0 0.0
    %954 = vmatpush1.msra.mxu0 0.0
    %955 = vmatprep.subr.mxu0 0.0
    %956 = vmatpush1.msra.mxu0 0.0
    %957 = vmatprep.subr.mxu0 0.0
    %958 = vmatpush1.msra.mxu0 0.0
    %959 = vmatprep.subr.mxu0 0.0
    %960 = vmatpush1.msra.mxu0 0.0
    %961 = vmatprep.subr.mxu0 0.0
    %962 = vmatpush1.msra.mxu0 0.0
    %963 = vmatprep.subr.mxu0 0.0
    %964 = vmatpush1.msra.mxu0 0.0
    %965 = vmatprep.subr.mxu0 0.0
    %966 = vmatpush1.msra.mxu0 0.0
    %967 = vmatprep.subr.mxu0 0.0
    %968 = vmatpush1.msra.mxu0 %v911
    %969 = vmatprep.subr.mxu0 0.0
    %970 = vmatpush2.msra.mxu0 0.0
    %971 = vmatprep.subr.mxu0 0.0
    %972 = vmatpush2.msra.mxu0 0.0
    %973 = vmatprep.subr.mxu0 0.0
    %974 = vmatpush2.msra.mxu0 0.0
    %975 = vmatprep.subr.mxu0 0.0
    %976 = vmatpush2.msra.mxu0 0.0
    %977 = vmatprep.subr.mxu0 0.0
    %978 = vmatpush2.msra.mxu0 0.0
    %979 = vmatprep.subr.mxu0 0.0
    %980 = vmatpush2.msra.mxu0 0.0
    %981 = vmatprep.subr.mxu0 0.0
    %982 = vmatpush2.msra.mxu0 0.0
    %983 = vmatprep.subr.mxu0 0.0
    %984 = vmatpush2.msra.mxu0 0.0
    %985 = vmatprep.subr.mxu0 0.0
    %986 = vmatpush2.msra.mxu0 0.0
    %987 = vmatprep.subr.mxu0 0.0
    %988 = vmatpush2.msra.mxu0 0.0
    %989 = vmatprep.subr.mxu0 0.0
    %990 = vmatpush2.msra.mxu0 0.0
    %991 = vmatprep.subr.mxu0 0.0
    %992 = vmatpush2.msra.mxu0 0.0
    %993 = vmatprep.subr.mxu0 0.0
    %994 = vmatpush2.msra.mxu0 0.0
    %995 = vmatprep.subr.mxu0 0.0
    %996 = vmatpush2.msra.mxu0 0.0
    %997 = vmatprep.subr.mxu0 0.0
    %998 = vmatpush2.msra.mxu0 0.0
    %999 = vmatprep.subr.mxu0 0.0
    %1000 = vmatpush2.msra.mxu0 0.0
    %1001 = vmatprep.mubr.f32.mxu0 0.0
    %1002 = vmatmul.mubr.f32.gmra.mxu0 %v914
    %v1003 = vpop.f32.mrf.mxu0
    %v1004 = vadd.f32 0.0, %v1003
    %v1005 = vpop.f32.mrf.mxu0
    %1006 = vmatprep.mubr.f32.mxu0 0.0
    %1007 = vmatmul.mubr.f32.gmra.mxu0 %v917
    %v1008 = vpop.f32.mrf.mxu0
    %v1009 = vadd.f32 0.0, %v1008
    %v1010 = vpop.f32.mrf.mxu0
    %1011 = vmatprep.mubr.f32.mxu0 0.0
    %1012 = vmatmul.mubr.f32.gmra.mxu0 %v920
    %v1013 = vpop.f32.mrf.mxu0
    %v1014 = vadd.f32 0.0, %v1013
    %v1015 = vpop.f32.mrf.mxu0
    %1016 = vmatprep.mubr.f32.mxu0 0.0
    %1017 = vmatmul.mubr.f32.gmra.mxu0 %v923
    %v1018 = vpop.f32.mrf.mxu0
    %v1019 = vadd.f32 0.0, %v1018
    %v1020 = vpop.f32.mrf.mxu0
    %1021 = vmatprep.mubr.f32.mxu0 0.0
    %1022 = vmatmul.mubr.f32.gmra.mxu0 %v926
    %v1023 = vpop.f32.mrf.mxu0
    %v1024 = vadd.f32 0.0, %v1023
    %v1025 = vpop.f32.mrf.mxu0
    %1026 = vmatprep.mubr.f32.mxu0 0.0
    %1027 = vmatmul.mubr.f32.gmra.mxu0 %v929
    %v1028 = vpop.f32.mrf.mxu0
    %v1029 = vadd.f32 0.0, %v1028
    %v1030 = vpop.f32.mrf.mxu0
    %1031 = vmatprep.mubr.f32.mxu0 0.0
    %1032 = vmatmul.mubr.f32.gmra.mxu0 %v932
    %v1033 = vpop.f32.mrf.mxu0
    %v1034 = vadd.f32 0.0, %v1033
    %v1035 = vpop.f32.mrf.mxu0
    %1036 = vmatprep.mubr.f32.mxu0 0.0
    %1037 = vmatmul.mubr.f32.gmra.mxu0 %v935
    %v1038 = vpop.f32.mrf.mxu0
    %v1039 = vadd.f32 0.0, %v1038
    %v1040 = vpop.f32.mrf.mxu0
    %1041 = vdwg.mxu0
    %v1042 = vmul.f32 %v873, %v1004
    %v1043 = vmul.f32 %v878, %v1009
    %v1044 = vmul.f32 %v883, %v1014
    %v1045 = vmul.f32 %v888, %v1019
    %v1046 = vmul.f32 %v893, %v1024
    %v1047 = vmul.f32 %v898, %v1029
    %v1048 = vmul.f32 %v903, %v1034
    %v1049 = vmul.f32 %v908, %v1039
    %v1050 = vld [vmem:[%s8] sm:$0xff]
    %v1051 = vld [vmem:[%s8 + $0x8] sm:$0xff]
    %vm1052 = vcmask 523264
    %v1054 = vsel %vm1052, %v1050, 0
    %v1057 = vsel %vm1052, %v1051, 0
    %1059 = vmatprep.subr.mxu0 0.0
    %1060 = vmatpush1.msra.mxu0 0.0
    %1061 = vmatprep.subr.mxu0 0.0
    %1062 = vmatpush1.msra.mxu0 0.0
    %1063 = vmatprep.subr.mxu0 0.0
    %1064 = vmatpush1.msra.mxu0 0.0
    %1065 = vmatprep.subr.mxu0 0.0
    %1066 = vmatpush1.msra.mxu0 0.0
    %1067 = vmatprep.subr.mxu0 0.0
    %1068 = vmatpush1.msra.mxu0 0.0
    %1069 = vmatprep.subr.mxu0 0.0
    %1070 = vmatpush1.msra.mxu0 0.0
    %1071 = vmatprep.subr.mxu0 0.0
    %1072 = vmatpush1.msra.mxu0 0.0
    %1073 = vmatprep.subr.mxu0 0.0
    %1074 = vmatpush1.msra.mxu0 0.0
    %1075 = vmatprep.subr.mxu0 0.0
    %1076 = vmatpush1.msra.mxu0 %v1049
    %1077 = vmatprep.subr.mxu0 0.0
    %1078 = vmatpush1.msra.mxu0 %v1048
    %1079 = vmatprep.subr.mxu0 0.0
    %1080 = vmatpush1.msra.mxu0 %v1047
    %1081 = vmatprep.subr.mxu0 0.0
    %1082 = vmatpush1.msra.mxu0 %v1046
    %1083 = vmatprep.subr.mxu0 0.0
    %1084 = vmatpush1.msra.mxu0 %v1045
    %1085 = vmatprep.subr.mxu0 0.0
    %1086 = vmatpush1.msra.mxu0 %v1044
    %1087 = vmatprep.subr.mxu0 0.0
    %1088 = vmatpush1.msra.mxu0 %v1043
    %1089 = vmatprep.subr.mxu0 0.0
    %1090 = vmatpush1.msra.mxu0 %v1042
    %1091 = vmatprep.subr.mxu0 0.0
    %1092 = vmatpush2.msra.mxu0 0.0
    %1093 = vmatprep.subr.mxu0 0.0
    %1094 = vmatpush2.msra.mxu0 0.0
    %1095 = vmatprep.subr.mxu0 0.0
    %1096 = vmatpush2.msra.mxu0 0.0
    %1097 = vmatprep.subr.mxu0 0.0
    %1098 = vmatpush2.msra.mxu0 0.0
    %1099 = vmatprep.subr.mxu0 0.0
    %1100 = vmatpush2.msra.mxu0 0.0
    %1101 = vmatprep.subr.mxu0 0.0
    %1102 = vmatpush2.msra.mxu0 0.0
    %1103 = vmatprep.subr.mxu0 0.0
    %1104 = vmatpush2.msra.mxu0 0.0
    %1105 = vmatprep.subr.mxu0 0.0
    %1106 = vmatpush2.msra.mxu0 0.0
    %1107 = vmatprep.subr.mxu0 0.0
    %1108 = vmatpush2.msra.mxu0 0.0
    %1109 = vmatprep.subr.mxu0 0.0
    %1110 = vmatpush2.msra.mxu0 0.0
    %1111 = vmatprep.subr.mxu0 0.0
    %1112 = vmatpush2.msra.mxu0 0.0
    %1113 = vmatprep.subr.mxu0 0.0
    %1114 = vmatpush2.msra.mxu0 0.0
    %1115 = vmatprep.subr.mxu0 0.0
    %1116 = vmatpush2.msra.mxu0 0.0
    %1117 = vmatprep.subr.mxu0 0.0
    %1118 = vmatpush2.msra.mxu0 0.0
    %1119 = vmatprep.subr.mxu0 0.0
    %1120 = vmatpush2.msra.mxu0 0.0
    %1121 = vmatprep.subr.mxu0 0.0
    %1122 = vmatpush2.msra.mxu0 0.0
    %1123 = vmatprep.mubr.f32.mxu0 0.0
    %1124 = vmatmul.mubr.f32.gmra.mxu0 %v1054
    %v1125 = vpop.f32.mrf.mxu0
    %v1126 = vadd.f32 0.0, %v1125
    %v1127 = vpop.f32.mrf.mxu0
    %1128 = vmatprep.mubr.f32.mxu0 0.0
    %1129 = vmatmul.mubr.f32.gmra.mxu0 %v1057
    %v1130 = vpop.f32.mrf.mxu0
    %v1131 = vadd.f32 0.0, %v1130
    %v1132 = vpop.f32.mrf.mxu0
    %1133 = vdwg.mxu0
    %1134 = vmatprep.subr.mxu0 0.0
    %1135 = vmatpush1.msra.mxu0 0.0
    %1136 = vmatprep.subr.mxu0 0.0
    %1137 = vmatpush1.msra.mxu0 0.0
    %1138 = vmatprep.subr.mxu0 0.0
    %1139 = vmatpush1.msra.mxu0 0.0
    %1140 = vmatprep.subr.mxu0 0.0
    %1141 = vmatpush1.msra.mxu0 0.0
    %1142 = vmatprep.subr.mxu0 0.0
    %1143 = vmatpush1.msra.mxu0 0.0
    %1144 = vmatprep.subr.mxu0 0.0
    %1145 = vmatpush1.msra.mxu0 0.0
    %1146 = vmatprep.subr.mxu0 0.0
    %1147 = vmatpush1.msra.mxu0 0.0
    %1148 = vmatprep.subr.mxu0 0.0
    %1149 = vmatpush1.msra.mxu0 0.0
    %1150 = vmatprep.subr.mxu0 0.0
    %1151 = vmatpush1.msra.mxu0 %v908
    %1152 = vmatprep.subr.mxu0 0.0
    %1153 = vmatpush1.msra.mxu0 %v903
    %1154 = vmatprep.subr.mxu0 0.0
    %1155 = vmatpush1.msra.mxu0 %v898
    %1156 = vmatprep.subr.mxu0 0.0
    %1157 = vmatpush1.msra.mxu0 %v893
    %1158 = vmatprep.subr.mxu0 0.0
    %1159 = vmatpush1.msra.mxu0 %v888
    %1160 = vmatprep.subr.mxu0 0.0
    %1161 = vmatpush1.msra.mxu0 %v883
    %1162 = vmatprep.subr.mxu0 0.0
    %1163 = vmatpush1.msra.mxu0 %v878
    %1164 = vmatprep.subr.mxu0 0.0
    %1165 = vmatpush1.msra.mxu0 %v873
    %1166 = vmatprep.subr.mxu0 0.0
    %1167 = vmatpush2.msra.mxu0 0.0
    %1168 = vmatprep.subr.mxu0 0.0
    %1169 = vmatpush2.msra.mxu0 0.0
    %1170 = vmatprep.subr.mxu0 0.0
    %1171 = vmatpush2.msra.mxu0 0.0
    %1172 = vmatprep.subr.mxu0 0.0
    %1173 = vmatpush2.msra.mxu0 0.0
    %1174 = vmatprep.subr.mxu0 0.0
    %1175 = vmatpush2.msra.mxu0 0.0
    %1176 = vmatprep.subr.mxu0 0.0
    %1177 = vmatpush2.msra.mxu0 0.0
    %1178 = vmatprep.subr.mxu0 0.0
    %1179 = vmatpush2.msra.mxu0 0.0
    %1180 = vmatprep.subr.mxu0 0.0
    %1181 = vmatpush2.msra.mxu0 0.0
    %1182 = vmatprep.subr.mxu0 0.0
    %1183 = vmatpush2.msra.mxu0 0.0
    %1184 = vmatprep.subr.mxu0 0.0
    %1185 = vmatpush2.msra.mxu0 0.0
    %1186 = vmatprep.subr.mxu0 0.0
    %1187 = vmatpush2.msra.mxu0 0.0
    %1188 = vmatprep.subr.mxu0 0.0
    %1189 = vmatpush2.msra.mxu0 0.0
    %1190 = vmatprep.subr.mxu0 0.0
    %1191 = vmatpush2.msra.mxu0 0.0
    %1192 = vmatprep.subr.mxu0 0.0
    %1193 = vmatpush2.msra.mxu0 0.0
    %1194 = vmatprep.subr.mxu0 0.0
    %1195 = vmatpush2.msra.mxu0 0.0
    %1196 = vmatprep.subr.mxu0 0.0
    %1197 = vmatpush2.msra.mxu0 0.0
    %1198 = vmatprep.mubr.f32.mxu0 0.0
    %1199 = vmatmul.mubr.f32.gmra.mxu0 %v1054
    %v1200 = vpop.f32.mrf.mxu0
    %v1201 = vadd.f32 0.0, %v1200
    %v1202 = vpop.f32.mrf.mxu0
    %1203 = vmatprep.mubr.f32.mxu0 0.0
    %1204 = vmatmul.mubr.f32.gmra.mxu0 %v1057
    %v1205 = vpop.f32.mrf.mxu0
    %v1206 = vadd.f32 0.0, %v1205
    %v1207 = vpop.f32.mrf.mxu0
    %1208 = vdwg.mxu0
    %v1209 = vmax.f32 %v1201, 1e-30
    %v1210 = vmax.f32 %v1206, 1e-30
    %v1211 = vrcp.pop %v1209
    %v1212 = vmul.f32 %v1126, %v1211
    %v1213 = vrcp.pop %v1210
    %v1214 = vmul.f32 %v1131, %v1213
    %v1215 = vld [vmem:[%s9] sm:$0xff]
    %v1216 = vld [vmem:[%s9 + $0x8] sm:$0xff]
    %v1217 = vld [vmem:[%s9 + $0x10] sm:$0xff]
    %v1218 = vld [vmem:[%s9 + $0x18] sm:$0xff]
    %v1220 = vsel %vm301, %v1212, 0
    %v1223 = vsel %vm301, %v1214, 0
    %1225 = vmatprep.subr.mxu0 0.0
    %1226 = vmatpush1.msra.mxu0 0.0
    %1227 = vmatprep.subr.mxu0 0.0
    %1228 = vmatpush1.msra.mxu0 0.0
    %1229 = vmatprep.subr.mxu0 0.0
    %1230 = vmatpush1.msra.mxu0 0.0
    %1231 = vmatprep.subr.mxu0 0.0
    %1232 = vmatpush1.msra.mxu0 0.0
    %1233 = vmatprep.subr.mxu0 0.0
    %1234 = vmatpush1.msra.mxu0 0.0
    %1235 = vmatprep.subr.mxu0 0.0
    %1236 = vmatpush1.msra.mxu0 0.0
    %1237 = vmatprep.subr.mxu0 0.0
    %1238 = vmatpush1.msra.mxu0 0.0
    %1239 = vmatprep.subr.mxu0 0.0
    %1240 = vmatpush1.msra.mxu0 0.0
    %1241 = vmatprep.subr.mxu0 0.0
    %1242 = vmatpush1.msra.mxu0 0.0
    %1243 = vmatprep.subr.mxu0 0.0
    %1244 = vmatpush1.msra.mxu0 0.0
    %1245 = vmatprep.subr.mxu0 0.0
    %1246 = vmatpush1.msra.mxu0 0.0
    %1247 = vmatprep.subr.mxu0 0.0
    %1248 = vmatpush1.msra.mxu0 0.0
    %1249 = vmatprep.subr.mxu0 0.0
    %1250 = vmatpush1.msra.mxu0 %v1218
    %1251 = vmatprep.subr.mxu0 0.0
    %1252 = vmatpush1.msra.mxu0 %v1217
    %1253 = vmatprep.subr.mxu0 0.0
    %1254 = vmatpush1.msra.mxu0 %v1216
    %1255 = vmatprep.subr.mxu0 0.0
    %1256 = vmatpush1.msra.mxu0 %v1215
    %1257 = vmatprep.subr.mxu0 0.0
    %1258 = vmatpush2.msra.mxu0 0.0
    %1259 = vmatprep.subr.mxu0 0.0
    %1260 = vmatpush2.msra.mxu0 0.0
    %1261 = vmatprep.subr.mxu0 0.0
    %1262 = vmatpush2.msra.mxu0 0.0
    %1263 = vmatprep.subr.mxu0 0.0
    %1264 = vmatpush2.msra.mxu0 0.0
    %1265 = vmatprep.subr.mxu0 0.0
    %1266 = vmatpush2.msra.mxu0 0.0
    %1267 = vmatprep.subr.mxu0 0.0
    %1268 = vmatpush2.msra.mxu0 0.0
    %1269 = vmatprep.subr.mxu0 0.0
    %1270 = vmatpush2.msra.mxu0 0.0
    %1271 = vmatprep.subr.mxu0 0.0
    %1272 = vmatpush2.msra.mxu0 0.0
    %1273 = vmatprep.subr.mxu0 0.0
    %1274 = vmatpush2.msra.mxu0 0.0
    %1275 = vmatprep.subr.mxu0 0.0
    %1276 = vmatpush2.msra.mxu0 0.0
    %1277 = vmatprep.subr.mxu0 0.0
    %1278 = vmatpush2.msra.mxu0 0.0
    %1279 = vmatprep.subr.mxu0 0.0
    %1280 = vmatpush2.msra.mxu0 0.0
    %1281 = vmatprep.subr.mxu0 0.0
    %1282 = vmatpush2.msra.mxu0 0.0
    %1283 = vmatprep.subr.mxu0 0.0
    %1284 = vmatpush2.msra.mxu0 0.0
    %1285 = vmatprep.subr.mxu0 0.0
    %1286 = vmatpush2.msra.mxu0 0.0
    %1287 = vmatprep.subr.mxu0 0.0
    %1288 = vmatpush2.msra.mxu0 0.0
    %1289 = vmatprep.mubr.f32.mxu0 0.0
    %1290 = vmatmul.mubr.f32.gmra.mxu0 %v1220
    %v1291 = vpop.f32.mrf.mxu0
    %v1292 = vadd.f32 0.0, %v1291
    %v1293 = vpop.f32.mrf.mxu0
    %1294 = vmatprep.mubr.f32.mxu0 0.0
    %1295 = vmatmul.mubr.f32.gmra.mxu0 %v1223
    %v1296 = vpop.f32.mrf.mxu0
    %v1297 = vadd.f32 0.0, %v1296
    %v1298 = vpop.f32.mrf.mxu0
    %1299 = vdwg.mxu0
    %v1300 = vld [vmem:[%s9 + $0x20] sm:$0xff]
    %v1301 = vld [vmem:[%s9 + $0x28] sm:$0xff]
    %v1302 = vmul.f32 %v1292, %v1300
    %v1303 = vmul.f32 %v1297, %v1301
    %v1304 = vld [vmem:[%s10] sm:$0x3]
    %v1305 = vld [vmem:[#allocation2 + $0x1] sm:$0x1]
    %v1307 = vlaneseq
    %v1308 = vshrl.u32 %v1307, 7
    %v1309 = vsub.s32 0, %v1308
    %v1310 = vrot.slane %v1305, %v1309
    %v1313 = vsel %vm464, %v1304, 0
    %1315 = vmatprep.subr.mxu0 0.0
    %1316 = vmatpush1.msra.mxu0 0.0
    %1317 = vmatprep.subr.mxu0 0.0
    %1318 = vmatpush1.msra.mxu0 0.0
    %1319 = vmatprep.subr.mxu0 0.0
    %1320 = vmatpush1.msra.mxu0 0.0
    %1321 = vmatprep.subr.mxu0 0.0
    %1322 = vmatpush1.msra.mxu0 0.0
    %1323 = vmatprep.subr.mxu0 0.0
    %1324 = vmatpush1.msra.mxu0 0.0
    %1325 = vmatprep.subr.mxu0 0.0
    %1326 = vmatpush1.msra.mxu0 0.0
    %1327 = vmatprep.subr.mxu0 0.0
    %1328 = vmatpush1.msra.mxu0 0.0
    %1329 = vmatprep.subr.mxu0 0.0
    %1330 = vmatpush1.msra.mxu0 0.0
    %1331 = vmatprep.subr.mxu0 0.0
    %1332 = vmatpush1.msra.mxu0 0.0
    %1333 = vmatprep.subr.mxu0 0.0
    %1334 = vmatpush1.msra.mxu0 0.0
    %1335 = vmatprep.subr.mxu0 0.0
    %1336 = vmatpush1.msra.mxu0 0.0
    %1337 = vmatprep.subr.mxu0 0.0
    %1338 = vmatpush1.msra.mxu0 0.0
    %1339 = vmatprep.subr.mxu0 0.0
    %1340 = vmatpush1.msra.mxu0 0.0
    %1341 = vmatprep.subr.mxu0 0.0
    %1342 = vmatpush1.msra.mxu0 0.0
    %1343 = vmatprep.subr.mxu0 0.0
    %1344 = vmatpush1.msra.mxu0 %v1303
    %1345 = vmatprep.subr.mxu0 0.0
    %1346 = vmatpush1.msra.mxu0 %v1302
    %1347 = vmatprep.subr.mxu0 0.0
    %1348 = vmatpush2.msra.mxu0 0.0
    %1349 = vmatprep.subr.mxu0 0.0
    %1350 = vmatpush2.msra.mxu0 0.0
    %1351 = vmatprep.subr.mxu0 0.0
    %1352 = vmatpush2.msra.mxu0 0.0
    %1353 = vmatprep.subr.mxu0 0.0
    %1354 = vmatpush2.msra.mxu0 0.0
    %1355 = vmatprep.subr.mxu0 0.0
    %1356 = vmatpush2.msra.mxu0 0.0
    %1357 = vmatprep.subr.mxu0 0.0
    %1358 = vmatpush2.msra.mxu0 0.0
    %1359 = vmatprep.subr.mxu0 0.0
    %1360 = vmatpush2.msra.mxu0 0.0
    %1361 = vmatprep.subr.mxu0 0.0
    %1362 = vmatpush2.msra.mxu0 0.0
    %1363 = vmatprep.subr.mxu0 0.0
    %1364 = vmatpush2.msra.mxu0 0.0
    %1365 = vmatprep.subr.mxu0 0.0
    %1366 = vmatpush2.msra.mxu0 0.0
    %1367 = vmatprep.subr.mxu0 0.0
    %1368 = vmatpush2.msra.mxu0 0.0
    %1369 = vmatprep.subr.mxu0 0.0
    %1370 = vmatpush2.msra.mxu0 0.0
    %1371 = vmatprep.subr.mxu0 0.0
    %1372 = vmatpush2.msra.mxu0 0.0
    %1373 = vmatprep.subr.mxu0 0.0
    %1374 = vmatpush2.msra.mxu0 0.0
    %1375 = vmatprep.subr.mxu0 0.0
    %1376 = vmatpush2.msra.mxu0 0.0
    %1377 = vmatprep.subr.mxu0 0.0
    %1378 = vmatpush2.msra.mxu0 0.0
    %1379 = vmatprep.mubr.f32.mxu0 0.0
    %1380 = vmatmul.mubr.f32.gmra.mxu0 %v1313
    %v1381 = vpop.f32.mrf.mxu0
    %v1382 = vadd.f32 %v1310, %v1381
    %v1383 = vpop.f32.mrf.mxu0
    %1384 = vdwg.mxu0
    %v1385 = vmax.f32 %v1382, 0.0
    %1386 = vst [vmem:[#allocation7] sm:$0x3] %v1385
    // Predicated region
    $region54: #{tpu_custom_call.1} parent=1 // pred_check
      _
    $region55: #{tpu_custom_call.1} parent=1 // pred_check_branch
      %1388 = sbr.rel (0) target = $region57
    $region56: #{tpu_custom_call.1} parent=1 // pred_region
      %s1390 = ssub.s32 32, 32
      %1391 = vsyncadd [#allocation4], %s1390
      %s1393 = sshll.u32 [#allocation7], 4
      %s1394 = int_to_ptr.vmem [resolvable:$true] %s1393
      %1396 = dma.vmem_to_hbm [thread:$0]  %s1394, 32, %s11, [#allocation4]
    $region57: #{tpu_custom_call.1} parent=1 // pred_fallthru
      _
    // Predicated region
    $region58: #{tpu_custom_call.1} parent=1 // pred_check
      _
    $region59: #{tpu_custom_call.1} parent=1 // pred_check_branch
      %1398 = sbr.rel (0) target = $region61
    $region60: #{tpu_custom_call.1} parent=1 // pred_region
      %1399 = dma.done [#allocation4], 32
    $region61: #{tpu_custom_call.1} parent=1 // pred_fallthru
      _
    %1400 = vsyncpa [#allocation3], 1
    %1401 = vsyncpa [#allocation6], 1
    %1402 = vsyncpa [#allocation4], 1

</llo_original>
